<compile_context>
chip_gen: v7x
topology: tpu7x:2x2x1
jax: 0.10.0
libtpu: 0.0.40
codegen_flags: <defaults>
</compile_context>

<pallas_src>
import jax
import jax.numpy as jnp
from jax import lax
from jax.experimental import pallas as pl
from jax.experimental.pallas import tpu as pltpu


def _round_up(x, m):
    return ((x + m - 1) // m) * m


def _cdiv(a, b):
    return -(-a // b)


# ----------------------------------------------------------------------------
# In-kernel math helpers (traced inside the Pallas kernels).
# ----------------------------------------------------------------------------
def _l2_normalize_rows(x):
    # F.normalize(x, 2, 1): x / max(||x||_2, 1e-12) == x * rsqrt(max(||x||^2, 1e-24))
    n2 = jnp.sum(x * x, axis=1, keepdims=True)
    return x * lax.rsqrt(jnp.maximum(n2, 1e-24))


def _p_norm_lane(diff, p_norm):
    """torch.norm(diff, p, dim=1) as a lane-dense (1, rows) row.

    Elementwise work happens in the natural (rows, dim) layout; the reduction
    is done after a tile-aligned transpose (rows, dim both multiples of 128)
    so it lands on the sublane axis and the result is lane-dense for an
    unmasked (2, tb) output store.
    """
    if p_norm == 1.0:
        y = jnp.abs(diff)
    elif p_norm == 2.0:
        y = diff * diff
    else:
        # |x|**p lowers to exp(p*log|x|): guard against log(0).
        y = jnp.maximum(jnp.abs(diff), 1e-30) ** p_norm
    s = jnp.sum(y.T, axis=0, keepdims=True)          # (1, rows)
    if p_norm == 1.0:
        return s
    elif p_norm == 2.0:
        return jnp.sqrt(s)
    else:
        return s ** (1.0 / p_norm)


def _onehot_gather(table_f32, ids_col):
    """Exact row gather via one-hot x table on the MXU.

    The f32 table is split into bf16 hi + lo parts, so the bf16 multipliers
    reproduce the f32 values to ~2^-16 relative error without relying on
    matmul precision flags.  The one-hot entries (0/1) are exact in bf16.

    table_f32: (n, d) float32 values (already loaded from VMEM).
    ids_col:   (rows, 1) int32 row indices.
    returns:   (rows, d) float32 gathered rows.
    """
    n = table_f32.shape[0]
    rows = ids_col.shape[0]
    onehot = (ids_col == lax.broadcasted_iota(jnp.int32, (rows, n), 1))
    onehot = onehot.astype(jnp.bfloat16)
    hi = table_f32.astype(jnp.bfloat16)
    lo = (table_f32 - hi.astype(jnp.float32)).astype(jnp.bfloat16)
    out = jnp.dot(onehot, hi, preferred_element_type=jnp.float32)
    out = out + jnp.dot(onehot, lo, preferred_element_type=jnp.float32)
    return out


# ----------------------------------------------------------------------------
# Kernel A: both tables resident in VMEM (small tables) -> no DMAs at all.
# ----------------------------------------------------------------------------
def _make_vmem_kernel(p_norm):
    def kernel(idx_ref,      # (tb, 6) int32:  pos_h, pos_r, pos_t, neg_h, neg_r, neg_t
               ent_ref,      # (num_ent, dim_p) full entity table (VMEM)
               rel_ref,      # (num_rel, dim_p) full relation table (VMEM)
               out_ref):     # (2, tb) f32: row0 = positive loss, row1 = negative loss
        idx = idx_ref[...]
        ent = ent_ref[...].astype(jnp.float32)
        rel = rel_ref[...].astype(jnp.float32)

        def egather(col):
            return _l2_normalize_rows(_onehot_gather(ent, idx[:, col:col + 1]))

        def rgather(col):
            return _onehot_gather(rel, idx[:, col:col + 1])

        pH, pR, pT = egather(0), rgather(1), egather(2)
        nH, nR, nT = egather(3), rgather(4), egather(5)

        pos = _p_norm_lane(pH + pR - pT, p_norm)      # (1, tb)
        neg = _p_norm_lane(nH + nR - nT, p_norm)      # (1, tb)
        out_ref[...] = jnp.concatenate([pos, neg], axis=0)   # single unmasked store

    return kernel


# ----------------------------------------------------------------------------
# Kernel B: entity table in HBM (row-gather DMAs), relation table in VMEM.
# ----------------------------------------------------------------------------
def _make_hbm_gather_kernel(p_norm, unroll=8):
    # idx6 row order: pos_h, pos_r, pos_t, neg_h, neg_r, neg_t
    ENT_STREAMS = (0, 2, 3, 5)

    def kernel(idx6_ref,            # SMEM scalar prefetch: (6, padded) int32
               rel_idx_ref,         # (tb, 2) int32  (pos_r, neg_r)
               rel_ref,             # (num_rel, dim_p) relation table (VMEM, full)
               ent_hbm,             # (num_ent, dim_p) entity table (HBM / ANY)
               out_ref,             # (2, tb) f32
               phb, ptb, nhb, ntb,  # (tb, dim_p) VMEM gather buffers
               sems):               # DMA semaphores, shape (4,)
        tb = phb.shape[0]
        base = pl.program_id(0) * tb
        bufs = (phb, ptb, nhb, ntb)

        # ---- issue all entity row-gather DMAs (partially unrolled) ---------
        # All SMEM index reads happen here, before any DMA wait.
        for k in range(4):
            s = ENT_STREAMS[k]
            buf = bufs[k]
            sem = sems.at[k]

            def issue_chunk(c, carry, s=s, buf=buf, sem=sem):
                r0 = c * unroll
                for u in range(unroll):
                    r = r0 + u
                    row = idx6_ref[s, base + r]
                    pltpu.make_async_copy(
                        ent_hbm.at[pl.ds(row, 1)],    # (1, dim_p) HBM row
                        buf.at[pl.ds(r, 1)],          # (1, dim_p) VMEM row
                        sem,
                    ).start()
                return carry

            lax.fori_loop(0, tb // unroll, issue_chunk, 0)

        # ---- relation gathers ride the MXU while the entity DMAs fly -------
        rel = rel_ref[...].astype(jnp.float32)
        rel_idx = rel_idx_ref[...]
        pR = _onehot_gather(rel, rel_idx[:, 0:1])
        nR = _onehot_gather(rel, rel_idx[:, 1:2])

        # ---- ONE wait per stream: descriptor covers the whole buffer -------
        # (DMA semaphores count bytes: tb row copies of dim_p*itemsize bytes
        #  sum to exactly one (tb, dim_p) buffer.)
        for k in range(4):
            pltpu.make_async_copy(bufs[k], bufs[k], sems.at[k]).wait()

        f32 = jnp.float32
        pH = _l2_normalize_rows(phb[...].astype(f32))
        pT = _l2_normalize_rows(ptb[...].astype(f32))
        nH = _l2_normalize_rows(nhb[...].astype(f32))
        nT = _l2_normalize_rows(ntb[...].astype(f32))

        pos = _p_norm_lane(pH + pR - pT, p_norm)      # (1, tb)
        neg = _p_norm_lane(nH + nR - nT, p_norm)      # (1, tb)
        out_ref[...] = jnp.concatenate([pos, neg], axis=0)

    return kernel


# ----------------------------------------------------------------------------
# Wrapper (replicates TransE.forward)
# ----------------------------------------------------------------------------
def transe_forward_pallas(entity_emb, relation_emb,
                          pos_h, pos_r, pos_t,
                          neg_h, neg_r, neg_t,
                          norm=2.0, block_rows=512,
                          force_hbm_gather=False):
    """Returns cat(positiveLoss, negativeLoss), shape (2*batch,), float32.

    entity_emb:   (numOfEntity, entityDimension)
    relation_emb: (numOfRelation, relationDimension)
    *_h, *_r, *_t: (batch,) integer indices
    """
    num_ent, ent_dim = entity_emb.shape
    num_rel, rel_dim = relation_emb.shape
    assert ent_dim == rel_dim, "h + r - t requires equal entity/relation dims"
    batch = pos_h.shape[0]
    p_norm = float(norm)

    # --- pad embedding dim to a lane-dense multiple of 128 ------------------
    # NOTE: for very large tables, do this once persistently outside the step.
    dim_p = _round_up(ent_dim, 128)
    if dim_p != ent_dim:
        entity_emb = jnp.pad(entity_emb, ((0, 0), (0, dim_p - ent_dim)))
        relation_emb = jnp.pad(relation_emb, ((0, 0), (0, dim_p - rel_dim)))

    # --- batch tiling: tb multiple of 128; prefer >=2 tiles (v7x megacore) ---
    padded128 = _round_up(max(batch, 1), 128)
    tb = max(128, (int(block_rows) // 128) * 128)
    tb = min(tb, padded128)
    if _cdiv(padded128, tb) < 2 and padded128 >= 256:
        tb = _round_up(padded128 // 2, 128)
    num_tiles = _cdiv(padded128, tb)
    padded = num_tiles * tb

    idx_cols = jnp.stack(
        [pos_h, pos_r, pos_t, neg_h, neg_r, neg_t], axis=1).astype(jnp.int32)
    if padded != batch:
        idx_cols = jnp.pad(idx_cols, ((0, padded - batch), (0, 0)))  # pad w/ index 0

    itemsize = jnp.dtype(entity_emb.dtype).itemsize
    ent_bytes = num_ent * dim_p * itemsize
    rel_bytes = num_rel * dim_p * itemsize
    # TODO(synk): relation tables larger than a few MiB would need the
    # DMA-gather path for relations too; not needed for typical KGs.

    small_entity_table = ((not force_hbm_gather)
                          and num_ent <= 2048
                          and ent_bytes <= (2 << 20))

    if small_entity_table:
        # ---- Path A: everything VMEM-resident, one-hot MXU gathers ---------
        vmem_limit = int(min(56 << 20,
                             max(32 << 20,
                                 4 * (ent_bytes + rel_bytes + 8 * tb * dim_p * 4))))
        out2d = pl.pallas_call(
            _make_vmem_kernel(p_norm),
            out_shape=jax.ShapeDtypeStruct((2, padded), jnp.float32),
            grid_spec=pltpu.PrefetchScalarGridSpec(
                num_scalar_prefetch=0,
                grid=(num_tiles,),
                in_specs=[
                    pl.BlockSpec((tb, 6), lambda i: (i, 0)),
                    pl.BlockSpec((num_ent, dim_p), lambda i: (0, 0)),
                    pl.BlockSpec((num_rel, dim_p), lambda i: (0, 0)),
                ],
                out_specs=pl.BlockSpec((2, tb), lambda i: (0, i)),
            ),
            compiler_params=pltpu.CompilerParams(
                dimension_semantics=("parallel",),
                vmem_limit_bytes=vmem_limit),
        )(idx_cols, entity_emb, relation_emb)
    else:
        # ---- Path B: entity rows gathered from HBM, relations from VMEM ----
        idx6 = idx_cols.T                                   # (6, padded) -> SMEM
        rel_idx = jnp.stack([pos_r, neg_r], axis=1).astype(jnp.int32)
        if padded != batch:
            rel_idx = jnp.pad(rel_idx, ((0, padded - batch), (0, 0)))

        scratch_bytes = 4 * tb * dim_p * itemsize
        vmem_limit = int(min(56 << 20,
                             max(32 << 20,
                                 3 * scratch_bytes + 2 * rel_bytes + (4 << 20))))
        out2d = pl.pallas_call(
            _make_hbm_gather_kernel(p_norm),
            out_shape=jax.ShapeDtypeStruct((2, padded), jnp.float32),
            grid_spec=pltpu.PrefetchScalarGridSpec(
                num_scalar_prefetch=1,
                grid=(num_tiles,),
                in_specs=[
                    pl.BlockSpec((tb, 2), lambda i, idx6_ref: (i, 0)),
                    pl.BlockSpec((num_rel, dim_p), lambda i, idx6_ref: (0, 0)),
                    pl.BlockSpec(memory_space=pl.ANY),     # entity table stays in HBM
                ],
                out_specs=pl.BlockSpec((2, tb), lambda i, idx6_ref: (0, i)),
                scratch_shapes=[pltpu.VMEM((tb, dim_p), entity_emb.dtype)] * 4
                               + [pltpu.SemaphoreType.DMA((4,))],
            ),
            compiler_params=pltpu.CompilerParams(
                dimension_semantics=("parallel",),
                vmem_limit_bytes=vmem_limit),
        )(idx6, rel_idx, relation_emb, entity_emb)

    # torch.cat((positiveLoss, negativeLoss)) -> (2*batch,)
    return jnp.concatenate([out2d[0, :batch], out2d[1, :batch]])


# ----------------------------------------------------------------------------
# Parameter init (mirrors TransE.__init__) and a pure-JAX reference.
# ----------------------------------------------------------------------------
def init_transe_params(key, num_entity, num_relation, entity_dim, relation_dim):
    k_e, k_r = jax.random.split(key)
    sqrtE = entity_dim ** 0.5
    sqrtR = relation_dim ** 0.5
    ent = jax.random.uniform(k_e, (num_entity, entity_dim),
                             minval=-6.0 / sqrtE, maxval=6.0 / sqrtE,
                             dtype=jnp.float32)
    rel = jax.random.uniform(k_r, (num_relation, relation_dim),
                             minval=-6.0 / sqrtR, maxval=6.0 / sqrtR,
                             dtype=jnp.float32)

    def l2n(x):
        n2 = jnp.sum(x * x, axis=1, keepdims=True)
        return x * lax.rsqrt(jnp.maximum(n2, 1e-24))

    return l2n(ent), l2n(rel)


def transe_reference(entity_emb, relation_emb,
                     pos_h, pos_r, pos_t, neg_h, neg_r, neg_t, norm):
    def l2n(x):
        n2 = jnp.sum(x * x, axis=1, keepdims=True)
        return x * lax.rsqrt(jnp.maximum(n2, 1e-24))

    pH = l2n(jnp.take(entity_emb, pos_h, axis=0).astype(jnp.float32))
    pR = jnp.take(relation_emb, pos_r, axis=0).astype(jnp.float32)
    pT = l2n(jnp.take(entity_emb, pos_t, axis=0).astype(jnp.float32))
    nH = l2n(jnp.take(entity_emb, neg_h, axis=0).astype(jnp.float32))
    nR = jnp.take(relation_emb, neg_r, axis=0).astype(jnp.float32)
    nT = l2n(jnp.take(entity_emb, neg_t, axis=0).astype(jnp.float32))

    def pnorm(x):
        if norm == 1.0:
            return jnp.sum(jnp.abs(x), axis=1)
        elif norm == 2.0:
            return jnp.sqrt(jnp.sum(x * x, axis=1))
        else:
            ax = jnp.maximum(jnp.abs(x), 1e-30)
            return jnp.sum(ax ** norm, axis=1) ** (1.0 / norm)

    return jnp.concatenate([pnorm(pH + pR - pT), pnorm(nH + nR - nT)])


if __name__ == "__main__":
    numOfEntity = 50
    numOfRelation = 10
    entityDimension = 32
    relationDimension = 32

    key = jax.random.PRNGKey(0)
    k_params, k_idx = jax.random.split(key)
    entity_emb, relation_emb = init_transe_params(
        k_params, numOfEntity, numOfRelation, entityDimension, relationDimension)

    def make_indices(k, batch):
        ks = jax.random.split(k, 6)
        return (jax.random.randint(ks[0], (batch,), 0, numOfEntity, dtype=jnp.int32),
                jax.random.randint(ks[1], (batch,), 0, numOfRelation, dtype=jnp.int32),
                jax.random.randint(ks[2], (batch,), 0, numOfEntity, dtype=jnp.int32),
                jax.random.randint(ks[3], (batch,), 0, numOfEntity, dtype=jnp.int32),
                jax.random.randint(ks[4], (batch,), 0, numOfRelation, dtype=jnp.int32),
                jax.random.randint(ks[5], (batch,), 0, numOfEntity, dtype=jnp.int32))

    k1, k2, k3 = jax.random.split(k_idx, 3)

    # --- check 1: small batch, single tile, L2 norm, all-VMEM one-hot path ---
    batch1 = 8
    idx1 = make_indices(k1, batch1)
    out1 = jax.block_until_ready(
        transe_forward_pallas(entity_emb, relation_emb, *idx1, norm=2.0))
    ref1 = transe_reference(entity_emb, relation_emb, *idx1, norm=2.0)
    assert out1.shape == (2 * batch1,)
    assert jnp.allclose(out1, ref1, atol=1e-4, rtol=1e-4), "check1 (VMEM path, L2) mismatch"

    # --- check 2: non-multiple batch, 2-tile parallel grid, L1 norm ----------
    batch2 = 200
    idx2 = make_indices(k2, batch2)
    out2 = jax.block_until_ready(
        transe_forward_pallas(entity_emb, relation_emb, *idx2, norm=1.0))
    ref2 = transe_reference(entity_emb, relation_emb, *idx2, norm=1.0)
    assert out2.shape == (2 * batch2,)
    assert jnp.allclose(out2, ref2, atol=1e-4, rtol=1e-4), "check2 (VMEM path, L1) mismatch"

    # --- check 3: HBM row-gather DMA path (entity table kept in HBM), L2 -----
    batch3 = 40
    idx3 = make_indices(k3, batch3)
    out3 = jax.block_until_ready(
        transe_forward_pallas(entity_emb, relation_emb, *idx3, norm=2.0,
                              force_hbm_gather=True))
    ref3 = transe_reference(entity_emb, relation_emb, *idx3, norm=2.0)
    assert out3.shape == (2 * batch3,)
    assert jnp.allclose(out3, ref3, atol=1e-4, rtol=1e-4), "check3 (HBM gather path) mismatch"

    print("KERNEL_OK")
</pallas_src>

<mosaic_0001>
module attributes {stable_mosaic.version = 11 : i64} {
  func.func @kernel(%arg0: i32, %arg1: memref<128x6xi32, #tpu.memory_space<vmem>>, %arg2: memref<50x128xf32, #tpu.memory_space<vmem>>, %arg3: memref<10x128xf32, #tpu.memory_space<vmem>>, %arg4: memref<2x128xf32, #tpu.memory_space<vmem>>) attributes {dimension_semantics = [#tpu.dimension_semantics<parallel>], iteration_bounds = array<i64: 1>, scalar_prefetch = 0 : i64, scratch_operands = 0 : i64, tpu.core_type = #tpu.core_type<tc>, window_params = [{transform_indices = @transform_0, window_bounds = array<i64: 128, 6>}, {pipeline_mode = #tpu.pipeline_mode<synchronous>, transform_indices = @transform_1, window_bounds = array<i64: 50, 128>}, {pipeline_mode = #tpu.pipeline_mode<synchronous>, transform_indices = @transform_2, window_bounds = array<i64: 10, 128>}, {transform_indices = @transform_3, window_bounds = array<i64: 2, 128>}]} {
    %c0 = arith.constant 0 : index
    %c0_0 = arith.constant 0 : index
    %0 = vector.load %arg1[%c0, %c0_0] : memref<128x6xi32, #tpu.memory_space<vmem>>, vector<128x6xi32>
    %c0_1 = arith.constant 0 : index
    %c0_2 = arith.constant 0 : index
    %1 = vector.load %arg2[%c0_1, %c0_2] : memref<50x128xf32, #tpu.memory_space<vmem>>, vector<50x128xf32>
    %c0_3 = arith.constant 0 : index
    %c0_4 = arith.constant 0 : index
    %2 = vector.load %arg3[%c0_3, %c0_4] : memref<10x128xf32, #tpu.memory_space<vmem>>, vector<10x128xf32>
    %3 = vector.extract_strided_slice %0 {offsets = [0, 0], sizes = [128, 1], strides = [1, 1]} : vector<128x6xi32> to vector<128x1xi32>
    %4 = tpu.iota {dimensions = array<i32: 1>} : vector<128x50xi32>
    %5 = vector.broadcast %3 : vector<128x1xi32> to vector<128x50xi32>
    %6 = arith.cmpi eq, %5, %4 : vector<128x50xi32>
    %7 = arith.extui %6 : vector<128x50xi1> to vector<128x50xi32>
    %8 = arith.sitofp %7 : vector<128x50xi32> to vector<128x50xf32>
    %9 = arith.truncf %8 : vector<128x50xf32> to vector<128x50xbf16>
    %10 = arith.truncf %1 : vector<50x128xf32> to vector<50x128xbf16>
    %11 = arith.extf %10 : vector<50x128xbf16> to vector<50x128xf32>
    %12 = arith.subf %1, %11 : vector<50x128xf32>
    %13 = arith.truncf %12 : vector<50x128xf32> to vector<50x128xbf16>
    %cst = arith.constant dense<0.000000e+00> : vector<128x128xf32>
    %14 = tpu.matmul %9, %10, %cst {dimension_numbers = #tpu.dot_dimension_numbers<[1], [0], [0], [1], [0, 0, 1, 1], [], []>} : vector<128x50xbf16>, vector<50x128xbf16>, vector<128x128xf32> -> vector<128x128xf32>
    %cst_5 = arith.constant dense<0.000000e+00> : vector<128x128xf32>
    %15 = tpu.matmul %9, %13, %cst_5 {dimension_numbers = #tpu.dot_dimension_numbers<[1], [0], [0], [1], [0, 0, 1, 1], [], []>} : vector<128x50xbf16>, vector<50x128xbf16>, vector<128x128xf32> -> vector<128x128xf32>
    %16 = arith.addf %14, %15 : vector<128x128xf32>
    %17 = arith.mulf %16, %16 : vector<128x128xf32>
    %cst_6 = arith.constant dense<0.000000e+00> : vector<128xf32>
    %18 = vector.multi_reduction <add>, %17, %cst_6 [1] : vector<128x128xf32> to vector<128xf32>
    %19 = vector.shape_cast %18 : vector<128xf32> to vector<128x1xf32>
    %cst_7 = arith.constant 1.000000e-24 : f32
    %20 = vector.broadcast %cst_7 : f32 to vector<128x1xf32>
    %21 = arith.maximumf %19, %20 : vector<128x1xf32>
    %22 = math.rsqrt %21 : vector<128x1xf32>
    %23 = vector.broadcast %22 : vector<128x1xf32> to vector<128x128xf32>
    %24 = arith.mulf %16, %23 : vector<128x128xf32>
    %25 = vector.extract_strided_slice %0 {offsets = [0, 1], sizes = [128, 1], strides = [1, 1]} : vector<128x6xi32> to vector<128x1xi32>
    %26 = tpu.iota {dimensions = array<i32: 1>} : vector<128x10xi32>
    %27 = vector.broadcast %25 : vector<128x1xi32> to vector<128x10xi32>
    %28 = arith.cmpi eq, %27, %26 : vector<128x10xi32>
    %29 = arith.extui %28 : vector<128x10xi1> to vector<128x10xi32>
    %30 = arith.sitofp %29 : vector<128x10xi32> to vector<128x10xf32>
    %31 = arith.truncf %30 : vector<128x10xf32> to vector<128x10xbf16>
    %32 = arith.truncf %2 : vector<10x128xf32> to vector<10x128xbf16>
    %33 = arith.extf %32 : vector<10x128xbf16> to vector<10x128xf32>
    %34 = arith.subf %2, %33 : vector<10x128xf32>
    %35 = arith.truncf %34 : vector<10x128xf32> to vector<10x128xbf16>
    %cst_8 = arith.constant dense<0.000000e+00> : vector<128x128xf32>
    %36 = tpu.matmul %31, %32, %cst_8 {dimension_numbers = #tpu.dot_dimension_numbers<[1], [0], [0], [1], [0, 0, 1, 1], [], []>} : vector<128x10xbf16>, vector<10x128xbf16>, vector<128x128xf32> -> vector<128x128xf32>
    %cst_9 = arith.constant dense<0.000000e+00> : vector<128x128xf32>
    %37 = tpu.matmul %31, %35, %cst_9 {dimension_numbers = #tpu.dot_dimension_numbers<[1], [0], [0], [1], [0, 0, 1, 1], [], []>} : vector<128x10xbf16>, vector<10x128xbf16>, vector<128x128xf32> -> vector<128x128xf32>
    %38 = arith.addf %36, %37 : vector<128x128xf32>
    %39 = vector.extract_strided_slice %0 {offsets = [0, 2], sizes = [128, 1], strides = [1, 1]} : vector<128x6xi32> to vector<128x1xi32>
    %40 = tpu.iota {dimensions = array<i32: 1>} : vector<128x50xi32>
    %41 = vector.broadcast %39 : vector<128x1xi32> to vector<128x50xi32>
    %42 = arith.cmpi eq, %41, %40 : vector<128x50xi32>
    %43 = arith.extui %42 : vector<128x50xi1> to vector<128x50xi32>
    %44 = arith.sitofp %43 : vector<128x50xi32> to vector<128x50xf32>
    %45 = arith.truncf %44 : vector<128x50xf32> to vector<128x50xbf16>
    %46 = arith.truncf %1 : vector<50x128xf32> to vector<50x128xbf16>
    %47 = arith.extf %46 : vector<50x128xbf16> to vector<50x128xf32>
    %48 = arith.subf %1, %47 : vector<50x128xf32>
    %49 = arith.truncf %48 : vector<50x128xf32> to vector<50x128xbf16>
    %cst_10 = arith.constant dense<0.000000e+00> : vector<128x128xf32>
    %50 = tpu.matmul %45, %46, %cst_10 {dimension_numbers = #tpu.dot_dimension_numbers<[1], [0], [0], [1], [0, 0, 1, 1], [], []>} : vector<128x50xbf16>, vector<50x128xbf16>, vector<128x128xf32> -> vector<128x128xf32>
    %cst_11 = arith.constant dense<0.000000e+00> : vector<128x128xf32>
    %51 = tpu.matmul %45, %49, %cst_11 {dimension_numbers = #tpu.dot_dimension_numbers<[1], [0], [0], [1], [0, 0, 1, 1], [], []>} : vector<128x50xbf16>, vector<50x128xbf16>, vector<128x128xf32> -> vector<128x128xf32>
    %52 = arith.addf %50, %51 : vector<128x128xf32>
    %53 = arith.mulf %52, %52 : vector<128x128xf32>
    %cst_12 = arith.constant dense<0.000000e+00> : vector<128xf32>
    %54 = vector.multi_reduction <add>, %53, %cst_12 [1] : vector<128x128xf32> to vector<128xf32>
    %55 = vector.shape_cast %54 : vector<128xf32> to vector<128x1xf32>
    %cst_13 = arith.constant 1.000000e-24 : f32
    %56 = vector.broadcast %cst_13 : f32 to vector<128x1xf32>
    %57 = arith.maximumf %55, %56 : vector<128x1xf32>
    %58 = math.rsqrt %57 : vector<128x1xf32>
    %59 = vector.broadcast %58 : vector<128x1xf32> to vector<128x128xf32>
    %60 = arith.mulf %52, %59 : vector<128x128xf32>
    %61 = vector.extract_strided_slice %0 {offsets = [0, 3], sizes = [128, 1], strides = [1, 1]} : vector<128x6xi32> to vector<128x1xi32>
    %62 = tpu.iota {dimensions = array<i32: 1>} : vector<128x50xi32>
    %63 = vector.broadcast %61 : vector<128x1xi32> to vector<128x50xi32>
    %64 = arith.cmpi eq, %63, %62 : vector<128x50xi32>
    %65 = arith.extui %64 : vector<128x50xi1> to vector<128x50xi32>
    %66 = arith.sitofp %65 : vector<128x50xi32> to vector<128x50xf32>
    %67 = arith.truncf %66 : vector<128x50xf32> to vector<128x50xbf16>
    %68 = arith.truncf %1 : vector<50x128xf32> to vector<50x128xbf16>
    %69 = arith.extf %68 : vector<50x128xbf16> to vector<50x128xf32>
    %70 = arith.subf %1, %69 : vector<50x128xf32>
    %71 = arith.truncf %70 : vector<50x128xf32> to vector<50x128xbf16>
    %cst_14 = arith.constant dense<0.000000e+00> : vector<128x128xf32>
    %72 = tpu.matmul %67, %68, %cst_14 {dimension_numbers = #tpu.dot_dimension_numbers<[1], [0], [0], [1], [0, 0, 1, 1], [], []>} : vector<128x50xbf16>, vector<50x128xbf16>, vector<128x128xf32> -> vector<128x128xf32>
    %cst_15 = arith.constant dense<0.000000e+00> : vector<128x128xf32>
    %73 = tpu.matmul %67, %71, %cst_15 {dimension_numbers = #tpu.dot_dimension_numbers<[1], [0], [0], [1], [0, 0, 1, 1], [], []>} : vector<128x50xbf16>, vector<50x128xbf16>, vector<128x128xf32> -> vector<128x128xf32>
    %74 = arith.addf %72, %73 : vector<128x128xf32>
    %75 = arith.mulf %74, %74 : vector<128x128xf32>
    %cst_16 = arith.constant dense<0.000000e+00> : vector<128xf32>
    %76 = vector.multi_reduction <add>, %75, %cst_16 [1] : vector<128x128xf32> to vector<128xf32>
    %77 = vector.shape_cast %76 : vector<128xf32> to vector<128x1xf32>
    %cst_17 = arith.constant 1.000000e-24 : f32
    %78 = vector.broadcast %cst_17 : f32 to vector<128x1xf32>
    %79 = arith.maximumf %77, %78 : vector<128x1xf32>
    %80 = math.rsqrt %79 : vector<128x1xf32>
    %81 = vector.broadcast %80 : vector<128x1xf32> to vector<128x128xf32>
    %82 = arith.mulf %74, %81 : vector<128x128xf32>
    %83 = vector.extract_strided_slice %0 {offsets = [0, 4], sizes = [128, 1], strides = [1, 1]} : vector<128x6xi32> to vector<128x1xi32>
    %84 = tpu.iota {dimensions = array<i32: 1>} : vector<128x10xi32>
    %85 = vector.broadcast %83 : vector<128x1xi32> to vector<128x10xi32>
    %86 = arith.cmpi eq, %85, %84 : vector<128x10xi32>
    %87 = arith.extui %86 : vector<128x10xi1> to vector<128x10xi32>
    %88 = arith.sitofp %87 : vector<128x10xi32> to vector<128x10xf32>
    %89 = arith.truncf %88 : vector<128x10xf32> to vector<128x10xbf16>
    %90 = arith.truncf %2 : vector<10x128xf32> to vector<10x128xbf16>
    %91 = arith.extf %90 : vector<10x128xbf16> to vector<10x128xf32>
    %92 = arith.subf %2, %91 : vector<10x128xf32>
    %93 = arith.truncf %92 : vector<10x128xf32> to vector<10x128xbf16>
    %cst_18 = arith.constant dense<0.000000e+00> : vector<128x128xf32>
    %94 = tpu.matmul %89, %90, %cst_18 {dimension_numbers = #tpu.dot_dimension_numbers<[1], [0], [0], [1], [0, 0, 1, 1], [], []>} : vector<128x10xbf16>, vector<10x128xbf16>, vector<128x128xf32> -> vector<128x128xf32>
    %cst_19 = arith.constant dense<0.000000e+00> : vector<128x128xf32>
    %95 = tpu.matmul %89, %93, %cst_19 {dimension_numbers = #tpu.dot_dimension_numbers<[1], [0], [0], [1], [0, 0, 1, 1], [], []>} : vector<128x10xbf16>, vector<10x128xbf16>, vector<128x128xf32> -> vector<128x128xf32>
    %96 = arith.addf %94, %95 : vector<128x128xf32>
    %97 = vector.extract_strided_slice %0 {offsets = [0, 5], sizes = [128, 1], strides = [1, 1]} : vector<128x6xi32> to vector<128x1xi32>
    %98 = tpu.iota {dimensions = array<i32: 1>} : vector<128x50xi32>
    %99 = vector.broadcast %97 : vector<128x1xi32> to vector<128x50xi32>
    %100 = arith.cmpi eq, %99, %98 : vector<128x50xi32>
    %101 = arith.extui %100 : vector<128x50xi1> to vector<128x50xi32>
    %102 = arith.sitofp %101 : vector<128x50xi32> to vector<128x50xf32>
    %103 = arith.truncf %102 : vector<128x50xf32> to vector<128x50xbf16>
    %104 = arith.truncf %1 : vector<50x128xf32> to vector<50x128xbf16>
    %105 = arith.extf %104 : vector<50x128xbf16> to vector<50x128xf32>
    %106 = arith.subf %1, %105 : vector<50x128xf32>
    %107 = arith.truncf %106 : vector<50x128xf32> to vector<50x128xbf16>
    %cst_20 = arith.constant dense<0.000000e+00> : vector<128x128xf32>
    %108 = tpu.matmul %103, %104, %cst_20 {dimension_numbers = #tpu.dot_dimension_numbers<[1], [0], [0], [1], [0, 0, 1, 1], [], []>} : vector<128x50xbf16>, vector<50x128xbf16>, vector<128x128xf32> -> vector<128x128xf32>
    %cst_21 = arith.constant dense<0.000000e+00> : vector<128x128xf32>
    %109 = tpu.matmul %103, %107, %cst_21 {dimension_numbers = #tpu.dot_dimension_numbers<[1], [0], [0], [1], [0, 0, 1, 1], [], []>} : vector<128x50xbf16>, vector<50x128xbf16>, vector<128x128xf32> -> vector<128x128xf32>
    %110 = arith.addf %108, %109 : vector<128x128xf32>
    %111 = arith.mulf %110, %110 : vector<128x128xf32>
    %cst_22 = arith.constant dense<0.000000e+00> : vector<128xf32>
    %112 = vector.multi_reduction <add>, %111, %cst_22 [1] : vector<128x128xf32> to vector<128xf32>
    %113 = vector.shape_cast %112 : vector<128xf32> to vector<128x1xf32>
    %cst_23 = arith.constant 1.000000e-24 : f32
    %114 = vector.broadcast %cst_23 : f32 to vector<128x1xf32>
    %115 = arith.maximumf %113, %114 : vector<128x1xf32>
    %116 = math.rsqrt %115 : vector<128x1xf32>
    %117 = vector.broadcast %116 : vector<128x1xf32> to vector<128x128xf32>
    %118 = arith.mulf %110, %117 : vector<128x128xf32>
    %119 = arith.addf %24, %38 : vector<128x128xf32>
    %120 = arith.subf %119, %60 : vector<128x128xf32>
    %121 = arith.mulf %120, %120 : vector<128x128xf32>
    %122 = tpu.transpose %121, [1, 0] : vector<128x128xf32> -> vector<128x128xf32>
    %cst_24 = arith.constant dense<0.000000e+00> : vector<128xf32>
    %123 = vector.multi_reduction <add>, %122, %cst_24 [0] : vector<128x128xf32> to vector<128xf32>
    %124 = vector.shape_cast %123 : vector<128xf32> to vector<1x128xf32>
    %125 = math.sqrt %124 : vector<1x128xf32>
    %126 = arith.addf %82, %96 : vector<128x128xf32>
    %127 = arith.subf %126, %118 : vector<128x128xf32>
    %128 = arith.mulf %127, %127 : vector<128x128xf32>
    %129 = tpu.transpose %128, [1, 0] : vector<128x128xf32> -> vector<128x128xf32>
    %cst_25 = arith.constant dense<0.000000e+00> : vector<128xf32>
    %130 = vector.multi_reduction <add>, %129, %cst_25 [0] : vector<128x128xf32> to vector<128xf32>
    %131 = vector.shape_cast %130 : vector<128xf32> to vector<1x128xf32>
    %132 = math.sqrt %131 : vector<1x128xf32>
    %133 = tpu.concatenate %125, %132 in 0 : vector<1x128xf32>, vector<1x128xf32> -> vector<2x128xf32>
    %c0_26 = arith.constant 0 : index
    %c0_27 = arith.constant 0 : index
    %134 = vector.load %arg4[%c0_26, %c0_27] : memref<2x128xf32, #tpu.memory_space<vmem>>, vector<2x128xf32>
    tpu.vector_store %arg4[%c0_26, %c0_27], %133 {strides = array<i32>} : memref<2x128xf32, #tpu.memory_space<vmem>>, vector<2x128xf32>,
    return
  }
  func.func @transform_0(%arg0: i32) -> (i32, i32) {
    %c0_i32 = arith.constant 0 : i32
    %c0_i32_0 = arith.constant 0 : i32
    return %arg0, %c0_i32 : i32, i32
  }
  func.func @transform_1(%arg0: i32) -> (i32, i32) {
    %c0_i32 = arith.constant 0 : i32
    %c0_i32_0 = arith.constant 0 : i32
    %c0_i32_1 = arith.constant 0 : i32
    return %c0_i32, %c0_i32_0 : i32, i32
  }
  func.func @transform_2(%arg0: i32) -> (i32, i32) {
    %c0_i32 = arith.constant 0 : i32
    %c0_i32_0 = arith.constant 0 : i32
    %c0_i32_1 = arith.constant 0 : i32
    return %c0_i32, %c0_i32_0 : i32, i32
  }
  func.func @transform_3(%arg0: i32) -> (i32, i32) {
    %c0_i32 = arith.constant 0 : i32
    %c0_i32_0 = arith.constant 0 : i32
    return %c0_i32, %arg0 : i32, i32
  }
}

</mosaic_0001>

<llo_original>
// kernel: tpu_custom_call.1
$region0: #{tpu_custom_call.1}
  #allocation0 [shape = 'u32[]', space=smem, size = 0x4, offset = 0x4, fixed_abs, tag = 'smem constant byte address 0x4 - core index']
  #allocation1 [shape = 'u32[144,128]{1,0:T(1,128)}', space=vmem, size = 0x12000, scoped, tag = 'internal scratch']
  %s0 = inlined_call_operand.vmem [shape: s32[128,6], index: 0, kind: input, shape index: {}]
  %s1 = inlined_call_operand.vmem [shape: f32[50,128], index: 1, kind: input, shape index: {}]
  %s2 = inlined_call_operand.vmem [shape: f32[10,128], index: 2, kind: input, shape index: {}]
  %s3 = inlined_call_operand.hbm [shape: f32[2,128], index: 3, kind: output, shape index: {}]
  %s4 = sld [smem:[#allocation0]]
  $region22: #{tpu_custom_call.1} parent=0
    _
  %s6 = ssub.s32 1, %s4
  %s7 = scalar_select 0, %s6, %s4
  $region1: #{tpu_custom_call.1} parent=0
    #allocation2 [shape = 'u8[1024]{0}', space=vmem, size = 0x400, scoped, tag = 'output window, operand 0, single buffered']
    #allocation3 [shape = 's32[1]{0}', space=sflag, size = 0x4, scoped, tag = 'scoped memory for tpu_custom_call.1']
    %8 = vsyncpa [#allocation3], 0
    // Predicated region
    $region2: #{tpu_custom_call.1} parent=1 // pred_check
      _
    $region3: #{tpu_custom_call.1} parent=1 // pred_check_branch
      %10 = sbr.rel (0) target = $region5
    $region4: #{tpu_custom_call.1} parent=1 // pred_region
      _
    $region5: #{tpu_custom_call.1} parent=1 // pred_fallthru
      _
    // Predicated region
    $region6: #{tpu_custom_call.1} parent=1 // pred_check
      _
    $region7: #{tpu_custom_call.1} parent=1 // pred_check_branch
      %12 = sbr.rel (0) target = $region9
    $region8: #{tpu_custom_call.1} parent=1 // pred_region
      _
    $region9: #{tpu_custom_call.1} parent=1 // pred_fallthru
      _
    // Predicated region
    $region10: #{tpu_custom_call.1} parent=1 // pred_check
      _
    $region11: #{tpu_custom_call.1} parent=1 // pred_check_branch
      %14 = sbr.rel (0) target = $region13
    $region12: #{tpu_custom_call.1} parent=1 // pred_region
      _
    $region13: #{tpu_custom_call.1} parent=1 // pred_fallthru
      _
    %v16 = vld [vmem:[%s0] sm:$0xff]
    %v17 = vld [vmem:[%s0 + $0x8] sm:$0xff]
    %v18 = vld [vmem:[%s0 + $0x10] sm:$0xff]
    %v19 = vld [vmem:[%s0 + $0x18] sm:$0xff]
    %v20 = vld [vmem:[%s0 + $0x20] sm:$0xff]
    %v21 = vld [vmem:[%s0 + $0x28] sm:$0xff]
    %v22 = vld [vmem:[%s0 + $0x30] sm:$0xff]
    %v23 = vld [vmem:[%s0 + $0x38] sm:$0xff]
    %v24 = vld [vmem:[%s0 + $0x40] sm:$0xff]
    %v25 = vld [vmem:[%s0 + $0x48] sm:$0xff]
    %v26 = vld [vmem:[%s0 + $0x50] sm:$0xff]
    %v27 = vld [vmem:[%s0 + $0x58] sm:$0xff]
    %v28 = vld [vmem:[%s0 + $0x60] sm:$0xff]
    %v29 = vld [vmem:[%s0 + $0x68] sm:$0xff]
    %v30 = vld [vmem:[%s0 + $0x70] sm:$0xff]
    %v31 = vld [vmem:[%s0 + $0x78] sm:$0xff]
    %v32 = vld [vmem:[%s1] sm:$0xff]
    %v33 = vld [vmem:[%s1 + $0x8] sm:$0xff]
    %v34 = vld [vmem:[%s1 + $0x10] sm:$0xff]
    %v35 = vld [vmem:[%s1 + $0x18] sm:$0xff]
    %v36 = vld [vmem:[%s1 + $0x20] sm:$0xff]
    %v37 = vld [vmem:[%s1 + $0x28] sm:$0xff]
    %v38 = vld [vmem:[%s1 + $0x30] sm:$0x3]
    %v39 = vld [vmem:[%s2] sm:$0xff]
    %v40 = vld [vmem:[%s2 + $0x8] sm:$0x3]
    %v41 = vlaneseq
    %v42 = vand.u32 %v41, 127
    %43 = vset.pattern.permute.xlu0 0
    %44 = vperm.xlu0 %43, %v16
    %v45 = vpop.permute.xlu0 %44
    %46 = vset.pattern.permute.xlu0 0
    %47 = vperm.xlu0 %46, %v17
    %v48 = vpop.permute.xlu0 %47
    %49 = vset.pattern.permute.xlu0 0
    %50 = vperm.xlu0 %49, %v18
    %v51 = vpop.permute.xlu0 %50
    %52 = vset.pattern.permute.xlu0 0
    %53 = vperm.xlu0 %52, %v19
    %v54 = vpop.permute.xlu0 %53
    %55 = vset.pattern.permute.xlu0 0
    %56 = vperm.xlu0 %55, %v20
    %v57 = vpop.permute.xlu0 %56
    %58 = vset.pattern.permute.xlu0 0
    %59 = vperm.xlu0 %58, %v21
    %v60 = vpop.permute.xlu0 %59
    %61 = vset.pattern.permute.xlu0 0
    %62 = vperm.xlu0 %61, %v22
    %v63 = vpop.permute.xlu0 %62
    %64 = vset.pattern.permute.xlu0 0
    %65 = vperm.xlu0 %64, %v23
    %v66 = vpop.permute.xlu0 %65
    %67 = vset.pattern.permute.xlu0 0
    %68 = vperm.xlu0 %67, %v24
    %v69 = vpop.permute.xlu0 %68
    %70 = vset.pattern.permute.xlu0 0
    %71 = vperm.xlu0 %70, %v25
    %v72 = vpop.permute.xlu0 %71
    %73 = vset.pattern.permute.xlu0 0
    %74 = vperm.xlu0 %73, %v26
    %v75 = vpop.permute.xlu0 %74
    %76 = vset.pattern.permute.xlu0 0
    %77 = vperm.xlu0 %76, %v27
    %v78 = vpop.permute.xlu0 %77
    %79 = vset.pattern.permute.xlu0 0
    %80 = vperm.xlu0 %79, %v28
    %v81 = vpop.permute.xlu0 %80
    %82 = vset.pattern.permute.xlu0 0
    %83 = vperm.xlu0 %82, %v29
    %v84 = vpop.permute.xlu0 %83
    %85 = vset.pattern.permute.xlu0 0
    %86 = vperm.xlu0 %85, %v30
    %v87 = vpop.permute.xlu0 %86
    %88 = vset.pattern.permute.xlu0 0
    %89 = vperm.xlu0 %88, %v31
    %v90 = vpop.permute.xlu0 %89
    %vm91 = vcmp.eq.s32.totalorder %v45, %v42
    %vm92 = vcmp.eq.s32.totalorder %v48, %v42
    %vm93 = vcmp.eq.s32.totalorder %v51, %v42
    %vm94 = vcmp.eq.s32.totalorder %v54, %v42
    %vm95 = vcmp.eq.s32.totalorder %v57, %v42
    %vm96 = vcmp.eq.s32.totalorder %v60, %v42
    %vm97 = vcmp.eq.s32.totalorder %v63, %v42
    %vm98 = vcmp.eq.s32.totalorder %v66, %v42
    %vm99 = vcmp.eq.s32.totalorder %v69, %v42
    %vm100 = vcmp.eq.s32.totalorder %v72, %v42
    %vm101 = vcmp.eq.s32.totalorder %v75, %v42
    %vm102 = vcmp.eq.s32.totalorder %v78, %v42
    %vm103 = vcmp.eq.s32.totalorder %v81, %v42
    %vm104 = vcmp.eq.s32.totalorder %v84, %v42
    %vm105 = vcmp.eq.s32.totalorder %v87, %v42
    %vm106 = vcmp.eq.s32.totalorder %v90, %v42
    %v107 = vsel %vm91, 1, 0
    %v108 = vsel %vm92, 1, 0
    %v109 = vsel %vm93, 1, 0
    %v110 = vsel %vm94, 1, 0
    %v111 = vsel %vm95, 1, 0
    %v112 = vsel %vm96, 1, 0
    %v113 = vsel %vm97, 1, 0
    %v114 = vsel %vm98, 1, 0
    %v115 = vsel %vm99, 1, 0
    %v116 = vsel %vm100, 1, 0
    %v117 = vsel %vm101, 1, 0
    %v118 = vsel %vm102, 1, 0
    %v119 = vsel %vm103, 1, 0
    %v120 = vsel %vm104, 1, 0
    %v121 = vsel %vm105, 1, 0
    %v122 = vsel %vm106, 1, 0
    %v123 = vcvt.s32.f32 %v107
    %v124 = vcvt.s32.f32 %v108
    %v125 = vcvt.s32.f32 %v109
    %v126 = vcvt.s32.f32 %v110
    %v127 = vcvt.s32.f32 %v111
    %v128 = vcvt.s32.f32 %v112
    %v129 = vcvt.s32.f32 %v113
    %v130 = vcvt.s32.f32 %v114
    %v131 = vcvt.s32.f32 %v115
    %v132 = vcvt.s32.f32 %v116
    %v133 = vcvt.s32.f32 %v117
    %v134 = vcvt.s32.f32 %v118
    %v135 = vcvt.s32.f32 %v119
    %v136 = vcvt.s32.f32 %v120
    %v137 = vcvt.s32.f32 %v121
    %v138 = vcvt.s32.f32 %v122
    %v139 = vpack.c.bf16 %v124, %v123
    %v140 = vpack.c.bf16 %v126, %v125
    %v141 = vpack.c.bf16 %v128, %v127
    %v142 = vpack.c.bf16 %v130, %v129
    %v143 = vpack.c.bf16 %v132, %v131
    %v144 = vpack.c.bf16 %v134, %v133
    %v145 = vpack.c.bf16 %v136, %v135
    %v146 = vpack.c.bf16 %v138, %v137
    %v147 = vpack.c.bf16 %v33, %v32
    %v148 = vpack.c.bf16 %v35, %v34
    %v149 = vpack.c.bf16 %v37, %v36
    %v150 = vpack.c.bf16 %v38, %v38
    %v151 = vunpack.c.l.bf16 %v147
    %v152 = vunpack.c.h.bf16 %v147
    %v153 = vunpack.c.l.bf16 %v148
    %v154 = vunpack.c.h.bf16 %v148
    %v155 = vunpack.c.l.bf16 %v149
    %v156 = vunpack.c.h.bf16 %v149
    %v157 = vunpack.c.l.bf16 %v150
    %v158 = vsub.f32 %v32, %v151
    %v159 = vsub.f32 %v33, %v152
    %v160 = vsub.f32 %v34, %v153
    %v161 = vsub.f32 %v35, %v154
    %v162 = vsub.f32 %v36, %v155
    %v163 = vsub.f32 %v37, %v156
    %v164 = vsub.f32 %v38, %v157
    %v165 = vpack.c.bf16 %v159, %v158
    %v166 = vpack.c.bf16 %v161, %v160
    %v167 = vpack.c.bf16 %v163, %v162
    %v168 = vpack.c.bf16 %v164, %v164
    %vm169 = vcmask 408576
    %v171 = vsel %vm169, %v139, 0
    %v174 = vsel %vm169, %v140, 0
    %v177 = vsel %vm169, %v141, 0
    %v180 = vsel %vm169, %v142, 0
    %v183 = vsel %vm169, %v143, 0
    %v186 = vsel %vm169, %v144, 0
    %v189 = vsel %vm169, %v145, 0
    %v192 = vsel %vm169, %v146, 0
    %vm194 = vcmask 1040384
    %v196 = vsel %vm194, %v168, 0
    %198 = vmatprep.subr.bf16.mxu0 0
    %199 = vmatpush1.bf16.msra.mxu0 %v165
    %200 = vmatprep.subr.bf16.mxu0 0
    %201 = vmatpush1.bf16.msra.mxu0 %v166
    %202 = vmatprep.subr.bf16.mxu0 0
    %203 = vmatpush1.bf16.msra.mxu0 %v167
    %204 = vmatprep.subr.bf16.mxu0 0
    %205 = vmatpush1.bf16.msra.mxu0 %v196
    %206 = vmatprep.subr.bf16.mxu0 0
    %207 = vmatpush1.bf16.msra.mxu0 0
    %208 = vmatprep.subr.bf16.mxu0 0
    %209 = vmatpush1.bf16.msra.mxu0 0
    %210 = vmatprep.subr.bf16.mxu0 0
    %211 = vmatpush1.bf16.msra.mxu0 0
    %212 = vmatprep.subr.bf16.mxu0 0
    %213 = vmatpush1.bf16.msra.mxu0 0
    %214 = vmatprep.subr.bf16.mxu0 0
    %215 = vmatpush1.bf16.msra.mxu0 0
    %216 = vmatprep.subr.bf16.mxu0 0
    %217 = vmatpush1.bf16.msra.mxu0 0
    %218 = vmatprep.subr.bf16.mxu0 0
    %219 = vmatpush1.bf16.msra.mxu0 0
    %220 = vmatprep.subr.bf16.mxu0 0
    %221 = vmatpush1.bf16.msra.mxu0 0
    %222 = vmatprep.subr.bf16.mxu0 0
    %223 = vmatpush1.bf16.msra.mxu0 0
    %224 = vmatprep.subr.bf16.mxu0 0
    %225 = vmatpush1.bf16.msra.mxu0 0
    %226 = vmatprep.subr.bf16.mxu0 0
    %227 = vmatpush1.bf16.msra.mxu0 0
    %228 = vmatprep.subr.bf16.mxu0 0
    %229 = vmatpush1.bf16.msra.mxu0 0
    %230 = vmatprep.mubr.bf16.mxu0 0
    %231 = vmatmul.mubr.bf16.gmra.mrb[0].mxu0 %v171
    %v232 = vpop.f32.mrb[0].mxu0
    %v233 = vadd.f32 0.0, %v232
    %v234 = vpop.f32.mrb[0].mxu0
    %v235 = vpop.f32.mrb[0].mxu0
    %v236 = vadd.f32 0.0, %v235
    %v237 = vpop.f32.mrb[0].mxu0
    %238 = vmatprep.mubr.bf16.mxu0 0
    %239 = vmatmul.mubr.bf16.gmra.mrb[0].mxu0 %v174
    %v240 = vpop.f32.mrb[0].mxu0
    %v241 = vadd.f32 0.0, %v240
    %v242 = vpop.f32.mrb[0].mxu0
    %v243 = vpop.f32.mrb[0].mxu0
    %v244 = vadd.f32 0.0, %v243
    %v245 = vpop.f32.mrb[0].mxu0
    %246 = vmatprep.mubr.bf16.mxu0 0
    %247 = vmatmul.mubr.bf16.gmra.mrb[0].mxu0 %v177
    %v248 = vpop.f32.mrb[0].mxu0
    %v249 = vadd.f32 0.0, %v248
    %v250 = vpop.f32.mrb[0].mxu0
    %v251 = vpop.f32.mrb[0].mxu0
    %v252 = vadd.f32 0.0, %v251
    %v253 = vpop.f32.mrb[0].mxu0
    %254 = vmatprep.mubr.bf16.mxu0 0
    %255 = vmatmul.mubr.bf16.gmra.mrb[0].mxu0 %v180
    %v256 = vpop.f32.mrb[0].mxu0
    %v257 = vadd.f32 0.0, %v256
    %v258 = vpop.f32.mrb[0].mxu0
    %v259 = vpop.f32.mrb[0].mxu0
    %v260 = vadd.f32 0.0, %v259
    %v261 = vpop.f32.mrb[0].mxu0
    %262 = vmatprep.mubr.bf16.mxu0 0
    %263 = vmatmul.mubr.bf16.gmra.mrb[0].mxu0 %v183
    %v264 = vpop.f32.mrb[0].mxu0
    %v265 = vadd.f32 0.0, %v264
    %v266 = vpop.f32.mrb[0].mxu0
    %v267 = vpop.f32.mrb[0].mxu0
    %v268 = vadd.f32 0.0, %v267
    %v269 = vpop.f32.mrb[0].mxu0
    %270 = vmatprep.mubr.bf16.mxu0 0
    %271 = vmatmul.mubr.bf16.gmra.mrb[0].mxu0 %v186
    %v272 = vpop.f32.mrb[0].mxu0
    %v273 = vadd.f32 0.0, %v272
    %v274 = vpop.f32.mrb[0].mxu0
    %v275 = vpop.f32.mrb[0].mxu0
    %v276 = vadd.f32 0.0, %v275
    %v277 = vpop.f32.mrb[0].mxu0
    %278 = vmatprep.mubr.bf16.mxu0 0
    %279 = vmatmul.mubr.bf16.gmra.mrb[0].mxu0 %v189
    %v280 = vpop.f32.mrb[0].mxu0
    %v281 = vadd.f32 0.0, %v280
    %v282 = vpop.f32.mrb[0].mxu0
    %v283 = vpop.f32.mrb[0].mxu0
    %v284 = vadd.f32 0.0, %v283
    %v285 = vpop.f32.mrb[0].mxu0
    %286 = vmatprep.mubr.bf16.mxu0 0
    %287 = vmatmul.mubr.bf16.gmra.mrb[0].mxu0 %v192
    %v288 = vpop.f32.mrb[0].mxu0
    %v289 = vadd.f32 0.0, %v288
    %v290 = vpop.f32.mrb[0].mxu0
    %v291 = vpop.f32.mrb[0].mxu0
    %v292 = vadd.f32 0.0, %v291
    %v293 = vpop.f32.mrb[0].mxu0
    %294 = vdwg.mxu0
    %v296 = vsel %vm194, %v150, 0
    %298 = vmatprep.subr.bf16.mxu0 0
    %299 = vmatpush1.bf16.msra.mxu0 %v147
    %300 = vmatprep.subr.bf16.mxu0 0
    %301 = vmatpush1.bf16.msra.mxu0 %v148
    %302 = vmatprep.subr.bf16.mxu0 0
    %303 = vmatpush1.bf16.msra.mxu0 %v149
    %304 = vmatprep.subr.bf16.mxu0 0
    %305 = vmatpush1.bf16.msra.mxu0 %v296
    %306 = vmatprep.subr.bf16.mxu0 0
    %307 = vmatpush1.bf16.msra.mxu0 0
    %308 = vmatprep.subr.bf16.mxu0 0
    %309 = vmatpush1.bf16.msra.mxu0 0
    %310 = vmatprep.subr.bf16.mxu0 0
    %311 = vmatpush1.bf16.msra.mxu0 0
    %312 = vmatprep.subr.bf16.mxu0 0
    %313 = vmatpush1.bf16.msra.mxu0 0
    %314 = vmatprep.subr.bf16.mxu0 0
    %315 = vmatpush1.bf16.msra.mxu0 0
    %316 = vmatprep.subr.bf16.mxu0 0
    %317 = vmatpush1.bf16.msra.mxu0 0
    %318 = vmatprep.subr.bf16.mxu0 0
    %319 = vmatpush1.bf16.msra.mxu0 0
    %320 = vmatprep.subr.bf16.mxu0 0
    %321 = vmatpush1.bf16.msra.mxu0 0
    %322 = vmatprep.subr.bf16.mxu0 0
    %323 = vmatpush1.bf16.msra.mxu0 0
    %324 = vmatprep.subr.bf16.mxu0 0
    %325 = vmatpush1.bf16.msra.mxu0 0
    %326 = vmatprep.subr.bf16.mxu0 0
    %327 = vmatpush1.bf16.msra.mxu0 0
    %328 = vmatprep.subr.bf16.mxu0 0
    %329 = vmatpush1.bf16.msra.mxu0 0
    %330 = vmatprep.mubr.bf16.mxu0 0
    %331 = vmatmul.mubr.bf16.gmra.mrb[0].mxu0 %v171
    %v332 = vpop.f32.mrb[0].mxu0
    %v333 = vadd.f32 %v233, %v332
    %v334 = vpop.f32.mrb[0].mxu0
    %v335 = vpop.f32.mrb[0].mxu0
    %v336 = vadd.f32 %v236, %v335
    %v337 = vpop.f32.mrb[0].mxu0
    %338 = vmatprep.mubr.bf16.mxu0 0
    %339 = vmatmul.mubr.bf16.gmra.mrb[0].mxu0 %v174
    %v340 = vpop.f32.mrb[0].mxu0
    %v341 = vadd.f32 %v241, %v340
    %v342 = vpop.f32.mrb[0].mxu0
    %v343 = vpop.f32.mrb[0].mxu0
    %v344 = vadd.f32 %v244, %v343
    %v345 = vpop.f32.mrb[0].mxu0
    %346 = vmatprep.mubr.bf16.mxu0 0
    %347 = vmatmul.mubr.bf16.gmra.mrb[0].mxu0 %v177
    %v348 = vpop.f32.mrb[0].mxu0
    %v349 = vadd.f32 %v249, %v348
    %v350 = vpop.f32.mrb[0].mxu0
    %v351 = vpop.f32.mrb[0].mxu0
    %v352 = vadd.f32 %v252, %v351
    %v353 = vpop.f32.mrb[0].mxu0
    %354 = vmatprep.mubr.bf16.mxu0 0
    %355 = vmatmul.mubr.bf16.gmra.mrb[0].mxu0 %v180
    %v356 = vpop.f32.mrb[0].mxu0
    %v357 = vadd.f32 %v257, %v356
    %v358 = vpop.f32.mrb[0].mxu0
    %v359 = vpop.f32.mrb[0].mxu0
    %v360 = vadd.f32 %v260, %v359
    %v361 = vpop.f32.mrb[0].mxu0
    %362 = vmatprep.mubr.bf16.mxu0 0
    %363 = vmatmul.mubr.bf16.gmra.mrb[0].mxu0 %v183
    %v364 = vpop.f32.mrb[0].mxu0
    %v365 = vadd.f32 %v265, %v364
    %v366 = vpop.f32.mrb[0].mxu0
    %v367 = vpop.f32.mrb[0].mxu0
    %v368 = vadd.f32 %v268, %v367
    %v369 = vpop.f32.mrb[0].mxu0
    %370 = vmatprep.mubr.bf16.mxu0 0
    %371 = vmatmul.mubr.bf16.gmra.mrb[0].mxu0 %v186
    %v372 = vpop.f32.mrb[0].mxu0
    %v373 = vadd.f32 %v273, %v372
    %v374 = vpop.f32.mrb[0].mxu0
    %v375 = vpop.f32.mrb[0].mxu0
    %v376 = vadd.f32 %v276, %v375
    %v377 = vpop.f32.mrb[0].mxu0
    %378 = vmatprep.mubr.bf16.mxu0 0
    %379 = vmatmul.mubr.bf16.gmra.mrb[0].mxu0 %v189
    %v380 = vpop.f32.mrb[0].mxu0
    %v381 = vadd.f32 %v281, %v380
    %v382 = vpop.f32.mrb[0].mxu0
    %v383 = vpop.f32.mrb[0].mxu0
    %v384 = vadd.f32 %v284, %v383
    %v385 = vpop.f32.mrb[0].mxu0
    %386 = vmatprep.mubr.bf16.mxu0 0
    %387 = vmatmul.mubr.bf16.gmra.mrb[0].mxu0 %v192
    %v388 = vpop.f32.mrb[0].mxu0
    %v389 = vadd.f32 %v289, %v388
    %v390 = vpop.f32.mrb[0].mxu0
    %v391 = vpop.f32.mrb[0].mxu0
    %v392 = vadd.f32 %v292, %v391
    %v393 = vpop.f32.mrb[0].mxu0
    %394 = vdwg.mxu0
    %v395 = vmul.f32 %v333, %v333
    %v396 = vmul.f32 %v336, %v336
    %v397 = vmul.f32 %v341, %v341
    %v398 = vmul.f32 %v344, %v344
    %v399 = vmul.f32 %v349, %v349
    %v400 = vmul.f32 %v352, %v352
    %v401 = vmul.f32 %v357, %v357
    %v402 = vmul.f32 %v360, %v360
    %v403 = vmul.f32 %v365, %v365
    %v404 = vmul.f32 %v368, %v368
    %v405 = vmul.f32 %v373, %v373
    %v406 = vmul.f32 %v376, %v376
    %v407 = vmul.f32 %v381, %v381
    %v408 = vmul.f32 %v384, %v384
    %v409 = vmul.f32 %v389, %v389
    %v410 = vmul.f32 %v392, %v392
    %411 = vadd.xlane.f32.xlu0 %v395
    %v412 = vpop.xlane.xlu0 %411
    %413 = vadd.xlane.f32.xlu0 %v396
    %v414 = vpop.xlane.xlu0 %413
    %415 = vadd.xlane.f32.xlu0 %v397
    %v416 = vpop.xlane.xlu0 %415
    %417 = vadd.xlane.f32.xlu0 %v398
    %v418 = vpop.xlane.xlu0 %417
    %419 = vadd.xlane.f32.xlu0 %v399
    %v420 = vpop.xlane.xlu0 %419
    %421 = vadd.xlane.f32.xlu0 %v400
    %v422 = vpop.xlane.xlu0 %421
    %423 = vadd.xlane.f32.xlu0 %v401
    %v424 = vpop.xlane.xlu0 %423
    %425 = vadd.xlane.f32.xlu0 %v402
    %v426 = vpop.xlane.xlu0 %425
    %427 = vadd.xlane.f32.xlu0 %v403
    %v428 = vpop.xlane.xlu0 %427
    %429 = vadd.xlane.f32.xlu0 %v404
    %v430 = vpop.xlane.xlu0 %429
    %431 = vadd.xlane.f32.xlu0 %v405
    %v432 = vpop.xlane.xlu0 %431
    %433 = vadd.xlane.f32.xlu0 %v406
    %v434 = vpop.xlane.xlu0 %433
    %435 = vadd.xlane.f32.xlu0 %v407
    %v436 = vpop.xlane.xlu0 %435
    %437 = vadd.xlane.f32.xlu0 %v408
    %v438 = vpop.xlane.xlu0 %437
    %439 = vadd.xlane.f32.xlu0 %v409
    %v440 = vpop.xlane.xlu0 %439
    %441 = vadd.xlane.f32.xlu0 %v410
    %v442 = vpop.xlane.xlu0 %441
    %v443 = vmax.f32 %v412, 1e-24
    %v444 = vmax.f32 %v414, 1e-24
    %v445 = vmax.f32 %v416, 1e-24
    %v446 = vmax.f32 %v418, 1e-24
    %v447 = vmax.f32 %v420, 1e-24
    %v448 = vmax.f32 %v422, 1e-24
    %v449 = vmax.f32 %v424, 1e-24
    %v450 = vmax.f32 %v426, 1e-24
    %v451 = vmax.f32 %v428, 1e-24
    %v452 = vmax.f32 %v430, 1e-24
    %v453 = vmax.f32 %v432, 1e-24
    %v454 = vmax.f32 %v434, 1e-24
    %v455 = vmax.f32 %v436, 1e-24
    %v456 = vmax.f32 %v438, 1e-24
    %v457 = vmax.f32 %v440, 1e-24
    %v458 = vmax.f32 %v442, 1e-24
    %v459 = vrsqrt.pop %v443
    %v460 = vrsqrt.pop %v444
    %v461 = vrsqrt.pop %v445
    %v462 = vrsqrt.pop %v446
    %v463 = vrsqrt.pop %v447
    %v464 = vrsqrt.pop %v448
    %v465 = vrsqrt.pop %v449
    %v466 = vrsqrt.pop %v450
    %v467 = vrsqrt.pop %v451
    %v468 = vrsqrt.pop %v452
    %v469 = vrsqrt.pop %v453
    %v470 = vrsqrt.pop %v454
    %v471 = vrsqrt.pop %v455
    %v472 = vrsqrt.pop %v456
    %v473 = vrsqrt.pop %v457
    %v474 = vrsqrt.pop %v458
    %v475 = vmul.f32 %v333, %v459
    %v476 = vmul.f32 %v336, %v460
    %v477 = vmul.f32 %v341, %v461
    %v478 = vmul.f32 %v344, %v462
    %v479 = vmul.f32 %v349, %v463
    %v480 = vmul.f32 %v352, %v464
    %v481 = vmul.f32 %v357, %v465
    %v482 = vmul.f32 %v360, %v466
    %v483 = vmul.f32 %v365, %v467
    %v484 = vmul.f32 %v368, %v468
    %v485 = vmul.f32 %v373, %v469
    %v486 = vmul.f32 %v376, %v470
    %v487 = vmul.f32 %v381, %v471
    %v488 = vmul.f32 %v384, %v472
    %v489 = vmul.f32 %v389, %v473
    %v490 = vmul.f32 %v392, %v474
    %491 = vset.pattern.permute.xlu0 1
    %492 = vperm.xlu0 %491, %v16
    %v493 = vpop.permute.xlu0 %492
    %494 = vset.pattern.permute.xlu0 1
    %495 = vperm.xlu0 %494, %v17
    %v496 = vpop.permute.xlu0 %495
    %497 = vset.pattern.permute.xlu0 1
    %498 = vperm.xlu0 %497, %v18
    %v499 = vpop.permute.xlu0 %498
    %500 = vset.pattern.permute.xlu0 1
    %501 = vperm.xlu0 %500, %v19
    %v502 = vpop.permute.xlu0 %501
    %503 = vset.pattern.permute.xlu0 1
    %504 = vperm.xlu0 %503, %v20
    %v505 = vpop.permute.xlu0 %504
    %506 = vset.pattern.permute.xlu0 1
    %507 = vperm.xlu0 %506, %v21
    %v508 = vpop.permute.xlu0 %507
    %509 = vset.pattern.permute.xlu0 1
    %510 = vperm.xlu0 %509, %v22
    %v511 = vpop.permute.xlu0 %510
    %512 = vset.pattern.permute.xlu0 1
    %513 = vperm.xlu0 %512, %v23
    %v514 = vpop.permute.xlu0 %513
    %515 = vset.pattern.permute.xlu0 1
    %516 = vperm.xlu0 %515, %v24
    %v517 = vpop.permute.xlu0 %516
    %518 = vset.pattern.permute.xlu0 1
    %519 = vperm.xlu0 %518, %v25
    %v520 = vpop.permute.xlu0 %519
    %521 = vset.pattern.permute.xlu0 1
    %522 = vperm.xlu0 %521, %v26
    %v523 = vpop.permute.xlu0 %522
    %524 = vset.pattern.permute.xlu0 1
    %525 = vperm.xlu0 %524, %v27
    %v526 = vpop.permute.xlu0 %525
    %527 = vset.pattern.permute.xlu0 1
    %528 = vperm.xlu0 %527, %v28
    %v529 = vpop.permute.xlu0 %528
    %530 = vset.pattern.permute.xlu0 1
    %531 = vperm.xlu0 %530, %v29
    %v532 = vpop.permute.xlu0 %531
    %533 = vset.pattern.permute.xlu0 1
    %534 = vperm.xlu0 %533, %v30
    %v535 = vpop.permute.xlu0 %534
    %536 = vset.pattern.permute.xlu0 1
    %537 = vperm.xlu0 %536, %v31
    %v538 = vpop.permute.xlu0 %537
    %vm539 = vcmp.eq.s32.totalorder %v493, %v42
    %vm540 = vcmp.eq.s32.totalorder %v496, %v42
    %vm541 = vcmp.eq.s32.totalorder %v499, %v42
    %vm542 = vcmp.eq.s32.totalorder %v502, %v42
    %vm543 = vcmp.eq.s32.totalorder %v505, %v42
    %vm544 = vcmp.eq.s32.totalorder %v508, %v42
    %vm545 = vcmp.eq.s32.totalorder %v511, %v42
    %vm546 = vcmp.eq.s32.totalorder %v514, %v42
    %vm547 = vcmp.eq.s32.totalorder %v517, %v42
    %vm548 = vcmp.eq.s32.totalorder %v520, %v42
    %vm549 = vcmp.eq.s32.totalorder %v523, %v42
    %vm550 = vcmp.eq.s32.totalorder %v526, %v42
    %vm551 = vcmp.eq.s32.totalorder %v529, %v42
    %vm552 = vcmp.eq.s32.totalorder %v532, %v42
    %vm553 = vcmp.eq.s32.totalorder %v535, %v42
    %vm554 = vcmp.eq.s32.totalorder %v538, %v42
    %v555 = vsel %vm539, 1, 0
    %v556 = vsel %vm540, 1, 0
    %v557 = vsel %vm541, 1, 0
    %v558 = vsel %vm542, 1, 0
    %v559 = vsel %vm543, 1, 0
    %v560 = vsel %vm544, 1, 0
    %v561 = vsel %vm545, 1, 0
    %v562 = vsel %vm546, 1, 0
    %v563 = vsel %vm547, 1, 0
    %v564 = vsel %vm548, 1, 0
    %v565 = vsel %vm549, 1, 0
    %v566 = vsel %vm550, 1, 0
    %v567 = vsel %vm551, 1, 0
    %v568 = vsel %vm552, 1, 0
    %v569 = vsel %vm553, 1, 0
    %v570 = vsel %vm554, 1, 0
    %v571 = vcvt.s32.f32 %v555
    %v572 = vcvt.s32.f32 %v556
    %v573 = vcvt.s32.f32 %v557
    %v574 = vcvt.s32.f32 %v558
    %v575 = vcvt.s32.f32 %v559
    %v576 = vcvt.s32.f32 %v560
    %v577 = vcvt.s32.f32 %v561
    %v578 = vcvt.s32.f32 %v562
    %v579 = vcvt.s32.f32 %v563
    %v580 = vcvt.s32.f32 %v564
    %v581 = vcvt.s32.f32 %v565
    %v582 = vcvt.s32.f32 %v566
    %v583 = vcvt.s32.f32 %v567
    %v584 = vcvt.s32.f32 %v568
    %v585 = vcvt.s32.f32 %v569
    %v586 = vcvt.s32.f32 %v570
    %v587 = vpack.c.bf16 %v572, %v571
    %v588 = vpack.c.bf16 %v574, %v573
    %v589 = vpack.c.bf16 %v576, %v575
    %v590 = vpack.c.bf16 %v578, %v577
    %v591 = vpack.c.bf16 %v580, %v579
    %v592 = vpack.c.bf16 %v582, %v581
    %v593 = vpack.c.bf16 %v584, %v583
    %v594 = vpack.c.bf16 %v586, %v585
    %v595 = vpack.c.bf16 %v40, %v39
    %v596 = vunpack.c.l.bf16 %v595
    %v597 = vunpack.c.h.bf16 %v595
    %v598 = vsub.f32 %v39, %v596
    %v599 = vsub.f32 %v40, %v597
    %v600 = vpack.c.bf16 %v599, %v598
    %vm601 = vcmask 80896
    %v603 = vsel %vm601, %v587, 0
    %v606 = vsel %vm601, %v588, 0
    %v609 = vsel %vm601, %v589, 0
    %v612 = vsel %vm601, %v590, 0
    %v615 = vsel %vm601, %v591, 0
    %v618 = vsel %vm601, %v592, 0
    %v621 = vsel %vm601, %v593, 0
    %v624 = vsel %vm601, %v594, 0
    %vm626 = vcmask 1044480
    %v628 = vsel %vm626, %v600, 0
    %630 = vmatprep.subr.bf16.mxu0 0
    %631 = vmatpush1.bf16.msra.mxu0 %v628
    %632 = vmatprep.subr.bf16.mxu0 0
    %633 = vmatpush1.bf16.msra.mxu0 0
    %634 = vmatprep.subr.bf16.mxu0 0
    %635 = vmatpush1.bf16.msra.mxu0 0
    %636 = vmatprep.subr.bf16.mxu0 0
    %637 = vmatpush1.bf16.msra.mxu0 0
    %638 = vmatprep.subr.bf16.mxu0 0
    %639 = vmatpush1.bf16.msra.mxu0 0
    %640 = vmatprep.subr.bf16.mxu0 0
    %641 = vmatpush1.bf16.msra.mxu0 0
    %642 = vmatprep.subr.bf16.mxu0 0
    %643 = vmatpush1.bf16.msra.mxu0 0
    %644 = vmatprep.subr.bf16.mxu0 0
    %645 = vmatpush1.bf16.msra.mxu0 0
    %646 = vmatprep.subr.bf16.mxu0 0
    %647 = vmatpush1.bf16.msra.mxu0 0
    %648 = vmatprep.subr.bf16.mxu0 0
    %649 = vmatpush1.bf16.msra.mxu0 0
    %650 = vmatprep.subr.bf16.mxu0 0
    %651 = vmatpush1.bf16.msra.mxu0 0
    %652 = vmatprep.subr.bf16.mxu0 0
    %653 = vmatpush1.bf16.msra.mxu0 0
    %654 = vmatprep.subr.bf16.mxu0 0
    %655 = vmatpush1.bf16.msra.mxu0 0
    %656 = vmatprep.subr.bf16.mxu0 0
    %657 = vmatpush1.bf16.msra.mxu0 0
    %658 = vmatprep.subr.bf16.mxu0 0
    %659 = vmatpush1.bf16.msra.mxu0 0
    %660 = vmatprep.subr.bf16.mxu0 0
    %661 = vmatpush1.bf16.msra.mxu0 0
    %662 = vmatprep.mubr.bf16.mxu0 0
    %663 = vmatmul.mubr.bf16.gmra.mrb[0].mxu0 %v603
    %v664 = vpop.f32.mrb[0].mxu0
    %v665 = vadd.f32 0.0, %v664
    %v666 = vpop.f32.mrb[0].mxu0
    %v667 = vpop.f32.mrb[0].mxu0
    %v668 = vadd.f32 0.0, %v667
    %v669 = vpop.f32.mrb[0].mxu0
    %670 = vmatprep.mubr.bf16.mxu0 0
    %671 = vmatmul.mubr.bf16.gmra.mrb[0].mxu0 %v606
    %v672 = vpop.f32.mrb[0].mxu0
    %v673 = vadd.f32 0.0, %v672
    %v674 = vpop.f32.mrb[0].mxu0
    %v675 = vpop.f32.mrb[0].mxu0
    %v676 = vadd.f32 0.0, %v675
    %v677 = vpop.f32.mrb[0].mxu0
    %678 = vmatprep.mubr.bf16.mxu0 0
    %679 = vmatmul.mubr.bf16.gmra.mrb[0].mxu0 %v609
    %v680 = vpop.f32.mrb[0].mxu0
    %v681 = vadd.f32 0.0, %v680
    %v682 = vpop.f32.mrb[0].mxu0
    %v683 = vpop.f32.mrb[0].mxu0
    %v684 = vadd.f32 0.0, %v683
    %v685 = vpop.f32.mrb[0].mxu0
    %686 = vmatprep.mubr.bf16.mxu0 0
    %687 = vmatmul.mubr.bf16.gmra.mrb[0].mxu0 %v612
    %v688 = vpop.f32.mrb[0].mxu0
    %v689 = vadd.f32 0.0, %v688
    %v690 = vpop.f32.mrb[0].mxu0
    %v691 = vpop.f32.mrb[0].mxu0
    %v692 = vadd.f32 0.0, %v691
    %v693 = vpop.f32.mrb[0].mxu0
    %694 = vmatprep.mubr.bf16.mxu0 0
    %695 = vmatmul.mubr.bf16.gmra.mrb[0].mxu0 %v615
    %v696 = vpop.f32.mrb[0].mxu0
    %v697 = vadd.f32 0.0, %v696
    %v698 = vpop.f32.mrb[0].mxu0
    %v699 = vpop.f32.mrb[0].mxu0
    %v700 = vadd.f32 0.0, %v699
    %v701 = vpop.f32.mrb[0].mxu0
    %702 = vmatprep.mubr.bf16.mxu0 0
    %703 = vmatmul.mubr.bf16.gmra.mrb[0].mxu0 %v618
    %v704 = vpop.f32.mrb[0].mxu0
    %v705 = vadd.f32 0.0, %v704
    %v706 = vpop.f32.mrb[0].mxu0
    %v707 = vpop.f32.mrb[0].mxu0
    %v708 = vadd.f32 0.0, %v707
    %v709 = vpop.f32.mrb[0].mxu0
    %710 = vmatprep.mubr.bf16.mxu0 0
    %711 = vmatmul.mubr.bf16.gmra.mrb[0].mxu0 %v621
    %v712 = vpop.f32.mrb[0].mxu0
    %v713 = vadd.f32 0.0, %v712
    %v714 = vpop.f32.mrb[0].mxu0
    %v715 = vpop.f32.mrb[0].mxu0
    %v716 = vadd.f32 0.0, %v715
    %v717 = vpop.f32.mrb[0].mxu0
    %718 = vmatprep.mubr.bf16.mxu0 0
    %719 = vmatmul.mubr.bf16.gmra.mrb[0].mxu0 %v624
    %v720 = vpop.f32.mrb[0].mxu0
    %v721 = vadd.f32 0.0, %v720
    %v722 = vpop.f32.mrb[0].mxu0
    %v723 = vpop.f32.mrb[0].mxu0
    %v724 = vadd.f32 0.0, %v723
    %v725 = vpop.f32.mrb[0].mxu0
    %726 = vdwg.mxu0
    %v728 = vsel %vm626, %v595, 0
    %730 = vmatprep.subr.bf16.mxu0 0
    %731 = vmatpush1.bf16.msra.mxu0 %v728
    %732 = vmatprep.subr.bf16.mxu0 0
    %733 = vmatpush1.bf16.msra.mxu0 0
    %734 = vmatprep.subr.bf16.mxu0 0
    %735 = vmatpush1.bf16.msra.mxu0 0
    %736 = vmatprep.subr.bf16.mxu0 0
    %737 = vmatpush1.bf16.msra.mxu0 0
    %738 = vmatprep.subr.bf16.mxu0 0
    %739 = vmatpush1.bf16.msra.mxu0 0
    %740 = vmatprep.subr.bf16.mxu0 0
    %741 = vmatpush1.bf16.msra.mxu0 0
    %742 = vmatprep.subr.bf16.mxu0 0
    %743 = vmatpush1.bf16.msra.mxu0 0
    %744 = vmatprep.subr.bf16.mxu0 0
    %745 = vmatpush1.bf16.msra.mxu0 0
    %746 = vmatprep.subr.bf16.mxu0 0
    %747 = vmatpush1.bf16.msra.mxu0 0
    %748 = vmatprep.subr.bf16.mxu0 0
    %749 = vmatpush1.bf16.msra.mxu0 0
    %750 = vmatprep.subr.bf16.mxu0 0
    %751 = vmatpush1.bf16.msra.mxu0 0
    %752 = vmatprep.subr.bf16.mxu0 0
    %753 = vmatpush1.bf16.msra.mxu0 0
    %754 = vmatprep.subr.bf16.mxu0 0
    %755 = vmatpush1.bf16.msra.mxu0 0
    %756 = vmatprep.subr.bf16.mxu0 0
    %757 = vmatpush1.bf16.msra.mxu0 0
    %758 = vmatprep.subr.bf16.mxu0 0
    %759 = vmatpush1.bf16.msra.mxu0 0
    %760 = vmatprep.subr.bf16.mxu0 0
    %761 = vmatpush1.bf16.msra.mxu0 0
    %762 = vmatprep.mubr.bf16.mxu0 0
    %763 = vmatmul.mubr.bf16.gmra.mrb[0].mxu0 %v603
    %v764 = vpop.f32.mrb[0].mxu0
    %v765 = vadd.f32 %v665, %v764
    %v766 = vpop.f32.mrb[0].mxu0
    %v767 = vpop.f32.mrb[0].mxu0
    %v768 = vadd.f32 %v668, %v767
    %v769 = vpop.f32.mrb[0].mxu0
    %770 = vmatprep.mubr.bf16.mxu0 0
    %771 = vmatmul.mubr.bf16.gmra.mrb[0].mxu0 %v606
    %v772 = vpop.f32.mrb[0].mxu0
    %v773 = vadd.f32 %v673, %v772
    %v774 = vpop.f32.mrb[0].mxu0
    %v775 = vpop.f32.mrb[0].mxu0
    %v776 = vadd.f32 %v676, %v775
    %v777 = vpop.f32.mrb[0].mxu0
    %778 = vmatprep.mubr.bf16.mxu0 0
    %779 = vmatmul.mubr.bf16.gmra.mrb[0].mxu0 %v609
    %v780 = vpop.f32.mrb[0].mxu0
    %v781 = vadd.f32 %v681, %v780
    %v782 = vpop.f32.mrb[0].mxu0
    %v783 = vpop.f32.mrb[0].mxu0
    %v784 = vadd.f32 %v684, %v783
    %v785 = vpop.f32.mrb[0].mxu0
    %786 = vmatprep.mubr.bf16.mxu0 0
    %787 = vmatmul.mubr.bf16.gmra.mrb[0].mxu0 %v612
    %v788 = vpop.f32.mrb[0].mxu0
    %v789 = vadd.f32 %v689, %v788
    %v790 = vpop.f32.mrb[0].mxu0
    %v791 = vpop.f32.mrb[0].mxu0
    %v792 = vadd.f32 %v692, %v791
    %v793 = vpop.f32.mrb[0].mxu0
    %794 = vmatprep.mubr.bf16.mxu0 0
    %795 = vmatmul.mubr.bf16.gmra.mrb[0].mxu0 %v615
    %v796 = vpop.f32.mrb[0].mxu0
    %v797 = vadd.f32 %v697, %v796
    %v798 = vpop.f32.mrb[0].mxu0
    %v799 = vpop.f32.mrb[0].mxu0
    %v800 = vadd.f32 %v700, %v799
    %v801 = vpop.f32.mrb[0].mxu0
    %802 = vmatprep.mubr.bf16.mxu0 0
    %803 = vmatmul.mubr.bf16.gmra.mrb[0].mxu0 %v618
    %v804 = vpop.f32.mrb[0].mxu0
    %v805 = vadd.f32 %v705, %v804
    %v806 = vpop.f32.mrb[0].mxu0
    %v807 = vpop.f32.mrb[0].mxu0
    %v808 = vadd.f32 %v708, %v807
    %v809 = vpop.f32.mrb[0].mxu0
    %810 = vmatprep.mubr.bf16.mxu0 0
    %811 = vmatmul.mubr.bf16.gmra.mrb[0].mxu0 %v621
    %v812 = vpop.f32.mrb[0].mxu0
    %v813 = vadd.f32 %v713, %v812
    %v814 = vpop.f32.mrb[0].mxu0
    %v815 = vpop.f32.mrb[0].mxu0
    %v816 = vadd.f32 %v716, %v815
    %v817 = vpop.f32.mrb[0].mxu0
    %818 = vmatprep.mubr.bf16.mxu0 0
    %819 = vmatmul.mubr.bf16.gmra.mrb[0].mxu0 %v624
    %v820 = vpop.f32.mrb[0].mxu0
    %v821 = vadd.f32 %v721, %v820
    %v822 = vpop.f32.mrb[0].mxu0
    %v823 = vpop.f32.mrb[0].mxu0
    %v824 = vadd.f32 %v724, %v823
    %v825 = vpop.f32.mrb[0].mxu0
    %826 = vdwg.mxu0
    %827 = vset.pattern.permute.xlu0 2
    %828 = vperm.xlu0 %827, %v16
    %v829 = vpop.permute.xlu0 %828
    %830 = vset.pattern.permute.xlu0 2
    %831 = vperm.xlu0 %830, %v17
    %v832 = vpop.permute.xlu0 %831
    %833 = vset.pattern.permute.xlu0 2
    %834 = vperm.xlu0 %833, %v18
    %v835 = vpop.permute.xlu0 %834
    %836 = vset.pattern.permute.xlu0 2
    %837 = vperm.xlu0 %836, %v19
    %v838 = vpop.permute.xlu0 %837
    %839 = vset.pattern.permute.xlu0 2
    %840 = vperm.xlu0 %839, %v20
    %v841 = vpop.permute.xlu0 %840
    %842 = vset.pattern.permute.xlu0 2
    %843 = vperm.xlu0 %842, %v21
    %v844 = vpop.permute.xlu0 %843
    %845 = vset.pattern.permute.xlu0 2
    %846 = vperm.xlu0 %845, %v22
    %v847 = vpop.permute.xlu0 %846
    %848 = vset.pattern.permute.xlu0 2
    %849 = vperm.xlu0 %848, %v23
    %v850 = vpop.permute.xlu0 %849
    %851 = vset.pattern.permute.xlu0 2
    %852 = vperm.xlu0 %851, %v24
    %v853 = vpop.permute.xlu0 %852
    %854 = vset.pattern.permute.xlu0 2
    %855 = vperm.xlu0 %854, %v25
    %v856 = vpop.permute.xlu0 %855
    %857 = vset.pattern.permute.xlu0 2
    %858 = vperm.xlu0 %857, %v26
    %v859 = vpop.permute.xlu0 %858
    %860 = vset.pattern.permute.xlu0 2
    %861 = vperm.xlu0 %860, %v27
    %v862 = vpop.permute.xlu0 %861
    %863 = vset.pattern.permute.xlu0 2
    %864 = vperm.xlu0 %863, %v28
    %v865 = vpop.permute.xlu0 %864
    %866 = vset.pattern.permute.xlu0 2
    %867 = vperm.xlu0 %866, %v29
    %v868 = vpop.permute.xlu0 %867
    %869 = vset.pattern.permute.xlu0 2
    %870 = vperm.xlu0 %869, %v30
    %v871 = vpop.permute.xlu0 %870
    %872 = vset.pattern.permute.xlu0 2
    %873 = vperm.xlu0 %872, %v31
    %v874 = vpop.permute.xlu0 %873
    %vm875 = vcmp.eq.s32.totalorder %v829, %v42
    %vm876 = vcmp.eq.s32.totalorder %v832, %v42
    %vm877 = vcmp.eq.s32.totalorder %v835, %v42
    %vm878 = vcmp.eq.s32.totalorder %v838, %v42
    %vm879 = vcmp.eq.s32.totalorder %v841, %v42
    %vm880 = vcmp.eq.s32.totalorder %v844, %v42
    %vm881 = vcmp.eq.s32.totalorder %v847, %v42
    %vm882 = vcmp.eq.s32.totalorder %v850, %v42
    %vm883 = vcmp.eq.s32.totalorder %v853, %v42
    %vm884 = vcmp.eq.s32.totalorder %v856, %v42
    %vm885 = vcmp.eq.s32.totalorder %v859, %v42
    %vm886 = vcmp.eq.s32.totalorder %v862, %v42
    %vm887 = vcmp.eq.s32.totalorder %v865, %v42
    %vm888 = vcmp.eq.s32.totalorder %v868, %v42
    %vm889 = vcmp.eq.s32.totalorder %v871, %v42
    %vm890 = vcmp.eq.s32.totalorder %v874, %v42
    %v891 = vsel %vm875, 1, 0
    %v892 = vsel %vm876, 1, 0
    %v893 = vsel %vm877, 1, 0
    %v894 = vsel %vm878, 1, 0
    %v895 = vsel %vm879, 1, 0
    %v896 = vsel %vm880, 1, 0
    %v897 = vsel %vm881, 1, 0
    %v898 = vsel %vm882, 1, 0
    %v899 = vsel %vm883, 1, 0
    %v900 = vsel %vm884, 1, 0
    %v901 = vsel %vm885, 1, 0
    %v902 = vsel %vm886, 1, 0
    %v903 = vsel %vm887, 1, 0
    %v904 = vsel %vm888, 1, 0
    %v905 = vsel %vm889, 1, 0
    %v906 = vsel %vm890, 1, 0
    %v907 = vcvt.s32.f32 %v891
    %v908 = vcvt.s32.f32 %v892
    %v909 = vcvt.s32.f32 %v893
    %v910 = vcvt.s32.f32 %v894
    %v911 = vcvt.s32.f32 %v895
    %v912 = vcvt.s32.f32 %v896
    %v913 = vcvt.s32.f32 %v897
    %v914 = vcvt.s32.f32 %v898
    %v915 = vcvt.s32.f32 %v899
    %v916 = vcvt.s32.f32 %v900
    %v917 = vcvt.s32.f32 %v901
    %v918 = vcvt.s32.f32 %v902
    %v919 = vcvt.s32.f32 %v903
    %v920 = vcvt.s32.f32 %v904
    %v921 = vcvt.s32.f32 %v905
    %v922 = vcvt.s32.f32 %v906
    %v923 = vpack.c.bf16 %v908, %v907
    %v924 = vpack.c.bf16 %v910, %v909
    %v925 = vpack.c.bf16 %v912, %v911
    %v926 = vpack.c.bf16 %v914, %v913
    %v927 = vpack.c.bf16 %v916, %v915
    %v928 = vpack.c.bf16 %v918, %v917
    %v929 = vpack.c.bf16 %v920, %v919
    %v930 = vpack.c.bf16 %v922, %v921
    %v932 = vsel %vm169, %v923, 0
    %v935 = vsel %vm169, %v924, 0
    %v938 = vsel %vm169, %v925, 0
    %v941 = vsel %vm169, %v926, 0
    %v944 = vsel %vm169, %v927, 0
    %v947 = vsel %vm169, %v928, 0
    %v950 = vsel %vm169, %v929, 0
    %v953 = vsel %vm169, %v930, 0
    %955 = vmatprep.subr.bf16.mxu0 0
    %956 = vmatpush1.bf16.msra.mxu0 %v165
    %957 = vmatprep.subr.bf16.mxu0 0
    %958 = vmatpush1.bf16.msra.mxu0 %v166
    %959 = vmatprep.subr.bf16.mxu0 0
    %960 = vmatpush1.bf16.msra.mxu0 %v167
    %961 = vmatprep.subr.bf16.mxu0 0
    %962 = vmatpush1.bf16.msra.mxu0 %v196
    %963 = vmatprep.subr.bf16.mxu0 0
    %964 = vmatpush1.bf16.msra.mxu0 0
    %965 = vmatprep.subr.bf16.mxu0 0
    %966 = vmatpush1.bf16.msra.mxu0 0
    %967 = vmatprep.subr.bf16.mxu0 0
    %968 = vmatpush1.bf16.msra.mxu0 0
    %969 = vmatprep.subr.bf16.mxu0 0
    %970 = vmatpush1.bf16.msra.mxu0 0
    %971 = vmatprep.subr.bf16.mxu0 0
    %972 = vmatpush1.bf16.msra.mxu0 0
    %973 = vmatprep.subr.bf16.mxu0 0
    %974 = vmatpush1.bf16.msra.mxu0 0
    %975 = vmatprep.subr.bf16.mxu0 0
    %976 = vmatpush1.bf16.msra.mxu0 0
    %977 = vmatprep.subr.bf16.mxu0 0
    %978 = vmatpush1.bf16.msra.mxu0 0
    %979 = vmatprep.subr.bf16.mxu0 0
    %980 = vmatpush1.bf16.msra.mxu0 0
    %981 = vmatprep.subr.bf16.mxu0 0
    %982 = vmatpush1.bf16.msra.mxu0 0
    %983 = vmatprep.subr.bf16.mxu0 0
    %984 = vmatpush1.bf16.msra.mxu0 0
    %985 = vmatprep.subr.bf16.mxu0 0
    %986 = vmatpush1.bf16.msra.mxu0 0
    %987 = vmatprep.mubr.bf16.mxu0 0
    %988 = vmatmul.mubr.bf16.gmra.mrb[0].mxu0 %v932
    %v989 = vpop.f32.mrb[0].mxu0
    %v990 = vadd.f32 0.0, %v989
    %v991 = vpop.f32.mrb[0].mxu0
    %v992 = vpop.f32.mrb[0].mxu0
    %v993 = vadd.f32 0.0, %v992
    %v994 = vpop.f32.mrb[0].mxu0
    %995 = vmatprep.mubr.bf16.mxu0 0
    %996 = vmatmul.mubr.bf16.gmra.mrb[0].mxu0 %v935
    %v997 = vpop.f32.mrb[0].mxu0
    %v998 = vadd.f32 0.0, %v997
    %v999 = vpop.f32.mrb[0].mxu0
    %v1000 = vpop.f32.mrb[0].mxu0
    %v1001 = vadd.f32 0.0, %v1000
    %v1002 = vpop.f32.mrb[0].mxu0
    %1003 = vmatprep.mubr.bf16.mxu0 0
    %1004 = vmatmul.mubr.bf16.gmra.mrb[0].mxu0 %v938
    %v1005 = vpop.f32.mrb[0].mxu0
    %v1006 = vadd.f32 0.0, %v1005
    %v1007 = vpop.f32.mrb[0].mxu0
    %v1008 = vpop.f32.mrb[0].mxu0
    %v1009 = vadd.f32 0.0, %v1008
    %v1010 = vpop.f32.mrb[0].mxu0
    %1011 = vmatprep.mubr.bf16.mxu0 0
    %1012 = vmatmul.mubr.bf16.gmra.mrb[0].mxu0 %v941
    %v1013 = vpop.f32.mrb[0].mxu0
    %v1014 = vadd.f32 0.0, %v1013
    %v1015 = vpop.f32.mrb[0].mxu0
    %v1016 = vpop.f32.mrb[0].mxu0
    %v1017 = vadd.f32 0.0, %v1016
    %v1018 = vpop.f32.mrb[0].mxu0
    %1019 = vmatprep.mubr.bf16.mxu0 0
    %1020 = vmatmul.mubr.bf16.gmra.mrb[0].mxu0 %v944
    %v1021 = vpop.f32.mrb[0].mxu0
    %v1022 = vadd.f32 0.0, %v1021
    %v1023 = vpop.f32.mrb[0].mxu0
    %v1024 = vpop.f32.mrb[0].mxu0
    %v1025 = vadd.f32 0.0, %v1024
    %v1026 = vpop.f32.mrb[0].mxu0
    %1027 = vmatprep.mubr.bf16.mxu0 0
    %1028 = vmatmul.mubr.bf16.gmra.mrb[0].mxu0 %v947
    %v1029 = vpop.f32.mrb[0].mxu0
    %v1030 = vadd.f32 0.0, %v1029
    %v1031 = vpop.f32.mrb[0].mxu0
    %v1032 = vpop.f32.mrb[0].mxu0
    %v1033 = vadd.f32 0.0, %v1032
    %v1034 = vpop.f32.mrb[0].mxu0
    %1035 = vmatprep.mubr.bf16.mxu0 0
    %1036 = vmatmul.mubr.bf16.gmra.mrb[0].mxu0 %v950
    %v1037 = vpop.f32.mrb[0].mxu0
    %v1038 = vadd.f32 0.0, %v1037
    %v1039 = vpop.f32.mrb[0].mxu0
    %v1040 = vpop.f32.mrb[0].mxu0
    %v1041 = vadd.f32 0.0, %v1040
    %v1042 = vpop.f32.mrb[0].mxu0
    %1043 = vmatprep.mubr.bf16.mxu0 0
    %1044 = vmatmul.mubr.bf16.gmra.mrb[0].mxu0 %v953
    %v1045 = vpop.f32.mrb[0].mxu0
    %v1046 = vadd.f32 0.0, %v1045
    %v1047 = vpop.f32.mrb[0].mxu0
    %v1048 = vpop.f32.mrb[0].mxu0
    %v1049 = vadd.f32 0.0, %v1048
    %v1050 = vpop.f32.mrb[0].mxu0
    %1051 = vdwg.mxu0
    %1052 = vmatprep.subr.bf16.mxu0 0
    %1053 = vmatpush1.bf16.msra.mxu0 %v147
    %1054 = vmatprep.subr.bf16.mxu0 0
    %1055 = vmatpush1.bf16.msra.mxu0 %v148
    %1056 = vmatprep.subr.bf16.mxu0 0
    %1057 = vmatpush1.bf16.msra.mxu0 %v149
    %1058 = vmatprep.subr.bf16.mxu0 0
    %1059 = vmatpush1.bf16.msra.mxu0 %v296
    %1060 = vmatprep.subr.bf16.mxu0 0
    %1061 = vmatpush1.bf16.msra.mxu0 0
    %1062 = vmatprep.subr.bf16.mxu0 0
    %1063 = vmatpush1.bf16.msra.mxu0 0
    %1064 = vmatprep.subr.bf16.mxu0 0
    %1065 = vmatpush1.bf16.msra.mxu0 0
    %1066 = vmatprep.subr.bf16.mxu0 0
    %1067 = vmatpush1.bf16.msra.mxu0 0
    %1068 = vmatprep.subr.bf16.mxu0 0
    %1069 = vmatpush1.bf16.msra.mxu0 0
    %1070 = vmatprep.subr.bf16.mxu0 0
    %1071 = vmatpush1.bf16.msra.mxu0 0
    %1072 = vmatprep.subr.bf16.mxu0 0
    %1073 = vmatpush1.bf16.msra.mxu0 0
    %1074 = vmatprep.subr.bf16.mxu0 0
    %1075 = vmatpush1.bf16.msra.mxu0 0
    %1076 = vmatprep.subr.bf16.mxu0 0
    %1077 = vmatpush1.bf16.msra.mxu0 0
    %1078 = vmatprep.subr.bf16.mxu0 0
    %1079 = vmatpush1.bf16.msra.mxu0 0
    %1080 = vmatprep.subr.bf16.mxu0 0
    %1081 = vmatpush1.bf16.msra.mxu0 0
    %1082 = vmatprep.subr.bf16.mxu0 0
    %1083 = vmatpush1.bf16.msra.mxu0 0
    %1084 = vmatprep.mubr.bf16.mxu0 0
    %1085 = vmatmul.mubr.bf16.gmra.mrb[0].mxu0 %v932
    %v1086 = vpop.f32.mrb[0].mxu0
    %v1087 = vadd.f32 %v990, %v1086
    %v1088 = vpop.f32.mrb[0].mxu0
    %v1089 = vpop.f32.mrb[0].mxu0
    %v1090 = vadd.f32 %v993, %v1089
    %v1091 = vpop.f32.mrb[0].mxu0
    %1092 = vmatprep.mubr.bf16.mxu0 0
    %1093 = vmatmul.mubr.bf16.gmra.mrb[0].mxu0 %v935
    %v1094 = vpop.f32.mrb[0].mxu0
    %v1095 = vadd.f32 %v998, %v1094
    %v1096 = vpop.f32.mrb[0].mxu0
    %v1097 = vpop.f32.mrb[0].mxu0
    %v1098 = vadd.f32 %v1001, %v1097
    %v1099 = vpop.f32.mrb[0].mxu0
    %1100 = vmatprep.mubr.bf16.mxu0 0
    %1101 = vmatmul.mubr.bf16.gmra.mrb[0].mxu0 %v938
    %v1102 = vpop.f32.mrb[0].mxu0
    %v1103 = vadd.f32 %v1006, %v1102
    %v1104 = vpop.f32.mrb[0].mxu0
    %v1105 = vpop.f32.mrb[0].mxu0
    %v1106 = vadd.f32 %v1009, %v1105
    %v1107 = vpop.f32.mrb[0].mxu0
    %1108 = vmatprep.mubr.bf16.mxu0 0
    %1109 = vmatmul.mubr.bf16.gmra.mrb[0].mxu0 %v941
    %v1110 = vpop.f32.mrb[0].mxu0
    %v1111 = vadd.f32 %v1014, %v1110
    %v1112 = vpop.f32.mrb[0].mxu0
    %v1113 = vpop.f32.mrb[0].mxu0
    %v1114 = vadd.f32 %v1017, %v1113
    %v1115 = vpop.f32.mrb[0].mxu0
    %1116 = vmatprep.mubr.bf16.mxu0 0
    %1117 = vmatmul.mubr.bf16.gmra.mrb[0].mxu0 %v944
    %v1118 = vpop.f32.mrb[0].mxu0
    %v1119 = vadd.f32 %v1022, %v1118
    %v1120 = vpop.f32.mrb[0].mxu0
    %v1121 = vpop.f32.mrb[0].mxu0
    %v1122 = vadd.f32 %v1025, %v1121
    %v1123 = vpop.f32.mrb[0].mxu0
    %1124 = vmatprep.mubr.bf16.mxu0 0
    %1125 = vmatmul.mubr.bf16.gmra.mrb[0].mxu0 %v947
    %v1126 = vpop.f32.mrb[0].mxu0
    %v1127 = vadd.f32 %v1030, %v1126
    %v1128 = vpop.f32.mrb[0].mxu0
    %v1129 = vpop.f32.mrb[0].mxu0
    %v1130 = vadd.f32 %v1033, %v1129
    %v1131 = vpop.f32.mrb[0].mxu0
    %1132 = vmatprep.mubr.bf16.mxu0 0
    %1133 = vmatmul.mubr.bf16.gmra.mrb[0].mxu0 %v950
    %v1134 = vpop.f32.mrb[0].mxu0
    %v1135 = vadd.f32 %v1038, %v1134
    %v1136 = vpop.f32.mrb[0].mxu0
    %v1137 = vpop.f32.mrb[0].mxu0
    %v1138 = vadd.f32 %v1041, %v1137
    %v1139 = vpop.f32.mrb[0].mxu0
    %1140 = vmatprep.mubr.bf16.mxu0 0
    %1141 = vmatmul.mubr.bf16.gmra.mrb[0].mxu0 %v953
    %v1142 = vpop.f32.mrb[0].mxu0
    %v1143 = vadd.f32 %v1046, %v1142
    %v1144 = vpop.f32.mrb[0].mxu0
    %v1145 = vpop.f32.mrb[0].mxu0
    %v1146 = vadd.f32 %v1049, %v1145
    %v1147 = vpop.f32.mrb[0].mxu0
    %1148 = vdwg.mxu0
    %v1149 = vmul.f32 %v1087, %v1087
    %v1150 = vmul.f32 %v1090, %v1090
    %v1151 = vmul.f32 %v1095, %v1095
    %v1152 = vmul.f32 %v1098, %v1098
    %v1153 = vmul.f32 %v1103, %v1103
    %v1154 = vmul.f32 %v1106, %v1106
    %v1155 = vmul.f32 %v1111, %v1111
    %v1156 = vmul.f32 %v1114, %v1114
    %v1157 = vmul.f32 %v1119, %v1119
    %v1158 = vmul.f32 %v1122, %v1122
    %v1159 = vmul.f32 %v1127, %v1127
    %v1160 = vmul.f32 %v1130, %v1130
    %v1161 = vmul.f32 %v1135, %v1135
    %v1162 = vmul.f32 %v1138, %v1138
    %v1163 = vmul.f32 %v1143, %v1143
    %v1164 = vmul.f32 %v1146, %v1146
    %1165 = vadd.xlane.f32.xlu0 %v1149
    %v1166 = vpop.xlane.xlu0 %1165
    %1167 = vadd.xlane.f32.xlu0 %v1150
    %v1168 = vpop.xlane.xlu0 %1167
    %1169 = vadd.xlane.f32.xlu0 %v1151
    %v1170 = vpop.xlane.xlu0 %1169
    %1171 = vadd.xlane.f32.xlu0 %v1152
    %v1172 = vpop.xlane.xlu0 %1171
    %1173 = vadd.xlane.f32.xlu0 %v1153
    %v1174 = vpop.xlane.xlu0 %1173
    %1175 = vadd.xlane.f32.xlu0 %v1154
    %v1176 = vpop.xlane.xlu0 %1175
    %1177 = vadd.xlane.f32.xlu0 %v1155
    %v1178 = vpop.xlane.xlu0 %1177
    %1179 = vadd.xlane.f32.xlu0 %v1156
    %v1180 = vpop.xlane.xlu0 %1179
    %1181 = vadd.xlane.f32.xlu0 %v1157
    %v1182 = vpop.xlane.xlu0 %1181
    %1183 = vadd.xlane.f32.xlu0 %v1158
    %v1184 = vpop.xlane.xlu0 %1183
    %1185 = vadd.xlane.f32.xlu0 %v1159
    %v1186 = vpop.xlane.xlu0 %1185
    %1187 = vadd.xlane.f32.xlu0 %v1160
    %v1188 = vpop.xlane.xlu0 %1187
    %1189 = vadd.xlane.f32.xlu0 %v1161
    %v1190 = vpop.xlane.xlu0 %1189
    %1191 = vadd.xlane.f32.xlu0 %v1162
    %v1192 = vpop.xlane.xlu0 %1191
    %1193 = vadd.xlane.f32.xlu0 %v1163
    %v1194 = vpop.xlane.xlu0 %1193
    %1195 = vadd.xlane.f32.xlu0 %v1164
    %v1196 = vpop.xlane.xlu0 %1195
    %v1197 = vmax.f32 %v1166, 1e-24
    %v1198 = vmax.f32 %v1168, 1e-24
    %v1199 = vmax.f32 %v1170, 1e-24
    %v1200 = vmax.f32 %v1172, 1e-24
    %v1201 = vmax.f32 %v1174, 1e-24
    %v1202 = vmax.f32 %v1176, 1e-24
    %v1203 = vmax.f32 %v1178, 1e-24
    %v1204 = vmax.f32 %v1180, 1e-24
    %v1205 = vmax.f32 %v1182, 1e-24
    %v1206 = vmax.f32 %v1184, 1e-24
    %v1207 = vmax.f32 %v1186, 1e-24
    %v1208 = vmax.f32 %v1188, 1e-24
    %v1209 = vmax.f32 %v1190, 1e-24
    %v1210 = vmax.f32 %v1192, 1e-24
    %v1211 = vmax.f32 %v1194, 1e-24
    %v1212 = vmax.f32 %v1196, 1e-24
    %v1213 = vrsqrt.pop %v1197
    %v1214 = vrsqrt.pop %v1198
    %v1215 = vrsqrt.pop %v1199
    %v1216 = vrsqrt.pop %v1200
    %v1217 = vrsqrt.pop %v1201
    %v1218 = vrsqrt.pop %v1202
    %v1219 = vrsqrt.pop %v1203
    %v1220 = vrsqrt.pop %v1204
    %v1221 = vrsqrt.pop %v1205
    %v1222 = vrsqrt.pop %v1206
    %v1223 = vrsqrt.pop %v1207
    %v1224 = vrsqrt.pop %v1208
    %v1225 = vrsqrt.pop %v1209
    %v1226 = vrsqrt.pop %v1210
    %v1227 = vrsqrt.pop %v1211
    %v1228 = vrsqrt.pop %v1212
    %v1229 = vmul.f32 %v1087, %v1213
    %v1230 = vmul.f32 %v1090, %v1214
    %v1231 = vmul.f32 %v1095, %v1215
    %v1232 = vmul.f32 %v1098, %v1216
    %v1233 = vmul.f32 %v1103, %v1217
    %v1234 = vmul.f32 %v1106, %v1218
    %v1235 = vmul.f32 %v1111, %v1219
    %v1236 = vmul.f32 %v1114, %v1220
    %v1237 = vmul.f32 %v1119, %v1221
    %v1238 = vmul.f32 %v1122, %v1222
    %v1239 = vmul.f32 %v1127, %v1223
    %v1240 = vmul.f32 %v1130, %v1224
    %v1241 = vmul.f32 %v1135, %v1225
    %v1242 = vmul.f32 %v1138, %v1226
    %v1243 = vmul.f32 %v1143, %v1227
    %v1244 = vmul.f32 %v1146, %v1228
    %1245 = vset.pattern.permute.xlu0 3
    %1246 = vperm.xlu0 %1245, %v16
    %v1247 = vpop.permute.xlu0 %1246
    %1248 = vset.pattern.permute.xlu0 3
    %1249 = vperm.xlu0 %1248, %v17
    %v1250 = vpop.permute.xlu0 %1249
    %1251 = vset.pattern.permute.xlu0 3
    %1252 = vperm.xlu0 %1251, %v18
    %v1253 = vpop.permute.xlu0 %1252
    %1254 = vset.pattern.permute.xlu0 3
    %1255 = vperm.xlu0 %1254, %v19
    %v1256 = vpop.permute.xlu0 %1255
    %1257 = vset.pattern.permute.xlu0 3
    %1258 = vperm.xlu0 %1257, %v20
    %v1259 = vpop.permute.xlu0 %1258
    %1260 = vset.pattern.permute.xlu0 3
    %1261 = vperm.xlu0 %1260, %v21
    %v1262 = vpop.permute.xlu0 %1261
    %1263 = vset.pattern.permute.xlu0 3
    %1264 = vperm.xlu0 %1263, %v22
    %v1265 = vpop.permute.xlu0 %1264
    %1266 = vset.pattern.permute.xlu0 3
    %1267 = vperm.xlu0 %1266, %v23
    %v1268 = vpop.permute.xlu0 %1267
    %1269 = vset.pattern.permute.xlu0 3
    %1270 = vperm.xlu0 %1269, %v24
    %v1271 = vpop.permute.xlu0 %1270
    %1272 = vset.pattern.permute.xlu0 3
    %1273 = vperm.xlu0 %1272, %v25
    %v1274 = vpop.permute.xlu0 %1273
    %1275 = vset.pattern.permute.xlu0 3
    %1276 = vperm.xlu0 %1275, %v26
    %v1277 = vpop.permute.xlu0 %1276
    %1278 = vset.pattern.permute.xlu0 3
    %1279 = vperm.xlu0 %1278, %v27
    %v1280 = vpop.permute.xlu0 %1279
    %1281 = vset.pattern.permute.xlu0 3
    %1282 = vperm.xlu0 %1281, %v28
    %v1283 = vpop.permute.xlu0 %1282
    %1284 = vset.pattern.permute.xlu0 3
    %1285 = vperm.xlu0 %1284, %v29
    %v1286 = vpop.permute.xlu0 %1285
    %1287 = vset.pattern.permute.xlu0 3
    %1288 = vperm.xlu0 %1287, %v30
    %v1289 = vpop.permute.xlu0 %1288
    %1290 = vset.pattern.permute.xlu0 3
    %1291 = vperm.xlu0 %1290, %v31
    %v1292 = vpop.permute.xlu0 %1291
    %vm1293 = vcmp.eq.s32.totalorder %v1247, %v42
    %vm1294 = vcmp.eq.s32.totalorder %v1250, %v42
    %vm1295 = vcmp.eq.s32.totalorder %v1253, %v42
    %vm1296 = vcmp.eq.s32.totalorder %v1256, %v42
    %vm1297 = vcmp.eq.s32.totalorder %v1259, %v42
    %vm1298 = vcmp.eq.s32.totalorder %v1262, %v42
    %vm1299 = vcmp.eq.s32.totalorder %v1265, %v42
    %vm1300 = vcmp.eq.s32.totalorder %v1268, %v42
    %vm1301 = vcmp.eq.s32.totalorder %v1271, %v42
    %vm1302 = vcmp.eq.s32.totalorder %v1274, %v42
    %vm1303 = vcmp.eq.s32.totalorder %v1277, %v42
    %vm1304 = vcmp.eq.s32.totalorder %v1280, %v42
    %vm1305 = vcmp.eq.s32.totalorder %v1283, %v42
    %vm1306 = vcmp.eq.s32.totalorder %v1286, %v42
    %vm1307 = vcmp.eq.s32.totalorder %v1289, %v42
    %vm1308 = vcmp.eq.s32.totalorder %v1292, %v42
    %v1309 = vsel %vm1293, 1, 0
    %v1310 = vsel %vm1294, 1, 0
    %v1311 = vsel %vm1295, 1, 0
    %v1312 = vsel %vm1296, 1, 0
    %v1313 = vsel %vm1297, 1, 0
    %v1314 = vsel %vm1298, 1, 0
    %v1315 = vsel %vm1299, 1, 0
    %v1316 = vsel %vm1300, 1, 0
    %v1317 = vsel %vm1301, 1, 0
    %v1318 = vsel %vm1302, 1, 0
    %v1319 = vsel %vm1303, 1, 0
    %v1320 = vsel %vm1304, 1, 0
    %v1321 = vsel %vm1305, 1, 0
    %v1322 = vsel %vm1306, 1, 0
    %v1323 = vsel %vm1307, 1, 0
    %v1324 = vsel %vm1308, 1, 0
    %v1325 = vcvt.s32.f32 %v1309
    %v1326 = vcvt.s32.f32 %v1310
    %v1327 = vcvt.s32.f32 %v1311
    %v1328 = vcvt.s32.f32 %v1312
    %v1329 = vcvt.s32.f32 %v1313
    %v1330 = vcvt.s32.f32 %v1314
    %v1331 = vcvt.s32.f32 %v1315
    %v1332 = vcvt.s32.f32 %v1316
    %v1333 = vcvt.s32.f32 %v1317
    %v1334 = vcvt.s32.f32 %v1318
    %v1335 = vcvt.s32.f32 %v1319
    %v1336 = vcvt.s32.f32 %v1320
    %v1337 = vcvt.s32.f32 %v1321
    %v1338 = vcvt.s32.f32 %v1322
    %v1339 = vcvt.s32.f32 %v1323
    %v1340 = vcvt.s32.f32 %v1324
    %v1341 = vpack.c.bf16 %v1326, %v1325
    %v1342 = vpack.c.bf16 %v1328, %v1327
    %v1343 = vpack.c.bf16 %v1330, %v1329
    %v1344 = vpack.c.bf16 %v1332, %v1331
    %v1345 = vpack.c.bf16 %v1334, %v1333
    %v1346 = vpack.c.bf16 %v1336, %v1335
    %v1347 = vpack.c.bf16 %v1338, %v1337
    %v1348 = vpack.c.bf16 %v1340, %v1339
    %v1350 = vsel %vm169, %v1341, 0
    %v1353 = vsel %vm169, %v1342, 0
    %v1356 = vsel %vm169, %v1343, 0
    %v1359 = vsel %vm169, %v1344, 0
    %v1362 = vsel %vm169, %v1345, 0
    %v1365 = vsel %vm169, %v1346, 0
    %v1368 = vsel %vm169, %v1347, 0
    %v1371 = vsel %vm169, %v1348, 0
    %1373 = vmatprep.subr.bf16.mxu0 0
    %1374 = vmatpush1.bf16.msra.mxu0 %v165
    %1375 = vmatprep.subr.bf16.mxu0 0
    %1376 = vmatpush1.bf16.msra.mxu0 %v166
    %1377 = vmatprep.subr.bf16.mxu0 0
    %1378 = vmatpush1.bf16.msra.mxu0 %v167
    %1379 = vmatprep.subr.bf16.mxu0 0
    %1380 = vmatpush1.bf16.msra.mxu0 %v196
    %1381 = vmatprep.subr.bf16.mxu0 0
    %1382 = vmatpush1.bf16.msra.mxu0 0
    %1383 = vmatprep.subr.bf16.mxu0 0
    %1384 = vmatpush1.bf16.msra.mxu0 0
    %1385 = vmatprep.subr.bf16.mxu0 0
    %1386 = vmatpush1.bf16.msra.mxu0 0
    %1387 = vmatprep.subr.bf16.mxu0 0
    %1388 = vmatpush1.bf16.msra.mxu0 0
    %1389 = vmatprep.subr.bf16.mxu0 0
    %1390 = vmatpush1.bf16.msra.mxu0 0
    %1391 = vmatprep.subr.bf16.mxu0 0
    %1392 = vmatpush1.bf16.msra.mxu0 0
    %1393 = vmatprep.subr.bf16.mxu0 0
    %1394 = vmatpush1.bf16.msra.mxu0 0
    %1395 = vmatprep.subr.bf16.mxu0 0
    %1396 = vmatpush1.bf16.msra.mxu0 0
    %1397 = vmatprep.subr.bf16.mxu0 0
    %1398 = vmatpush1.bf16.msra.mxu0 0
    %1399 = vmatprep.subr.bf16.mxu0 0
    %1400 = vmatpush1.bf16.msra.mxu0 0
    %1401 = vmatprep.subr.bf16.mxu0 0
    %1402 = vmatpush1.bf16.msra.mxu0 0
    %1403 = vmatprep.subr.bf16.mxu0 0
    %1404 = vmatpush1.bf16.msra.mxu0 0
    %1405 = vmatprep.mubr.bf16.mxu0 0
    %1406 = vmatmul.mubr.bf16.gmra.mrb[0].mxu0 %v1350
    %v1407 = vpop.f32.mrb[0].mxu0
    %v1408 = vadd.f32 0.0, %v1407
    %v1409 = vpop.f32.mrb[0].mxu0
    %v1410 = vpop.f32.mrb[0].mxu0
    %v1411 = vadd.f32 0.0, %v1410
    %v1412 = vpop.f32.mrb[0].mxu0
    %1413 = vmatprep.mubr.bf16.mxu0 0
    %1414 = vmatmul.mubr.bf16.gmra.mrb[0].mxu0 %v1353
    %v1415 = vpop.f32.mrb[0].mxu0
    %v1416 = vadd.f32 0.0, %v1415
    %v1417 = vpop.f32.mrb[0].mxu0
    %v1418 = vpop.f32.mrb[0].mxu0
    %v1419 = vadd.f32 0.0, %v1418
    %v1420 = vpop.f32.mrb[0].mxu0
    %1421 = vmatprep.mubr.bf16.mxu0 0
    %1422 = vmatmul.mubr.bf16.gmra.mrb[0].mxu0 %v1356
    %v1423 = vpop.f32.mrb[0].mxu0
    %v1424 = vadd.f32 0.0, %v1423
    %v1425 = vpop.f32.mrb[0].mxu0
    %v1426 = vpop.f32.mrb[0].mxu0
    %v1427 = vadd.f32 0.0, %v1426
    %v1428 = vpop.f32.mrb[0].mxu0
    %1429 = vmatprep.mubr.bf16.mxu0 0
    %1430 = vmatmul.mubr.bf16.gmra.mrb[0].mxu0 %v1359
    %v1431 = vpop.f32.mrb[0].mxu0
    %v1432 = vadd.f32 0.0, %v1431
    %v1433 = vpop.f32.mrb[0].mxu0
    %v1434 = vpop.f32.mrb[0].mxu0
    %v1435 = vadd.f32 0.0, %v1434
    %v1436 = vpop.f32.mrb[0].mxu0
    %1437 = vmatprep.mubr.bf16.mxu0 0
    %1438 = vmatmul.mubr.bf16.gmra.mrb[0].mxu0 %v1362
    %v1439 = vpop.f32.mrb[0].mxu0
    %v1440 = vadd.f32 0.0, %v1439
    %v1441 = vpop.f32.mrb[0].mxu0
    %v1442 = vpop.f32.mrb[0].mxu0
    %v1443 = vadd.f32 0.0, %v1442
    %v1444 = vpop.f32.mrb[0].mxu0
    %1445 = vmatprep.mubr.bf16.mxu0 0
    %1446 = vmatmul.mubr.bf16.gmra.mrb[0].mxu0 %v1365
    %v1447 = vpop.f32.mrb[0].mxu0
    %v1448 = vadd.f32 0.0, %v1447
    %v1449 = vpop.f32.mrb[0].mxu0
    %v1450 = vpop.f32.mrb[0].mxu0
    %v1451 = vadd.f32 0.0, %v1450
    %v1452 = vpop.f32.mrb[0].mxu0
    %1453 = vmatprep.mubr.bf16.mxu0 0
    %1454 = vmatmul.mubr.bf16.gmra.mrb[0].mxu0 %v1368
    %v1455 = vpop.f32.mrb[0].mxu0
    %v1456 = vadd.f32 0.0, %v1455
    %v1457 = vpop.f32.mrb[0].mxu0
    %v1458 = vpop.f32.mrb[0].mxu0
    %v1459 = vadd.f32 0.0, %v1458
    %v1460 = vpop.f32.mrb[0].mxu0
    %1461 = vmatprep.mubr.bf16.mxu0 0
    %1462 = vmatmul.mubr.bf16.gmra.mrb[0].mxu0 %v1371
    %v1463 = vpop.f32.mrb[0].mxu0
    %v1464 = vadd.f32 0.0, %v1463
    %v1465 = vpop.f32.mrb[0].mxu0
    %v1466 = vpop.f32.mrb[0].mxu0
    %v1467 = vadd.f32 0.0, %v1466
    %v1468 = vpop.f32.mrb[0].mxu0
    %1469 = vdwg.mxu0
    %1470 = vmatprep.subr.bf16.mxu0 0
    %1471 = vmatpush1.bf16.msra.mxu0 %v147
    %1472 = vmatprep.subr.bf16.mxu0 0
    %1473 = vmatpush1.bf16.msra.mxu0 %v148
    %1474 = vmatprep.subr.bf16.mxu0 0
    %1475 = vmatpush1.bf16.msra.mxu0 %v149
    %1476 = vmatprep.subr.bf16.mxu0 0
    %1477 = vmatpush1.bf16.msra.mxu0 %v296
    %1478 = vmatprep.subr.bf16.mxu0 0
    %1479 = vmatpush1.bf16.msra.mxu0 0
    %1480 = vmatprep.subr.bf16.mxu0 0
    %1481 = vmatpush1.bf16.msra.mxu0 0
    %1482 = vmatprep.subr.bf16.mxu0 0
    %1483 = vmatpush1.bf16.msra.mxu0 0
    %1484 = vmatprep.subr.bf16.mxu0 0
    %1485 = vmatpush1.bf16.msra.mxu0 0
    %1486 = vmatprep.subr.bf16.mxu0 0
    %1487 = vmatpush1.bf16.msra.mxu0 0
    %1488 = vmatprep.subr.bf16.mxu0 0
    %1489 = vmatpush1.bf16.msra.mxu0 0
    %1490 = vmatprep.subr.bf16.mxu0 0
    %1491 = vmatpush1.bf16.msra.mxu0 0
    %1492 = vmatprep.subr.bf16.mxu0 0
    %1493 = vmatpush1.bf16.msra.mxu0 0
    %1494 = vmatprep.subr.bf16.mxu0 0
    %1495 = vmatpush1.bf16.msra.mxu0 0
    %1496 = vmatprep.subr.bf16.mxu0 0
    %1497 = vmatpush1.bf16.msra.mxu0 0
    %1498 = vmatprep.subr.bf16.mxu0 0
    %1499 = vmatpush1.bf16.msra.mxu0 0
    %1500 = vmatprep.subr.bf16.mxu0 0
    %1501 = vmatpush1.bf16.msra.mxu0 0
    %1502 = vmatprep.mubr.bf16.mxu0 0
    %1503 = vmatmul.mubr.bf16.gmra.mrb[0].mxu0 %v1350
    %v1504 = vpop.f32.mrb[0].mxu0
    %v1505 = vadd.f32 %v1408, %v1504
    %v1506 = vpop.f32.mrb[0].mxu0
    %v1507 = vpop.f32.mrb[0].mxu0
    %v1508 = vadd.f32 %v1411, %v1507
    %v1509 = vpop.f32.mrb[0].mxu0
    %1510 = vmatprep.mubr.bf16.mxu0 0
    %1511 = vmatmul.mubr.bf16.gmra.mrb[0].mxu0 %v1353
    %v1512 = vpop.f32.mrb[0].mxu0
    %v1513 = vadd.f32 %v1416, %v1512
    %v1514 = vpop.f32.mrb[0].mxu0
    %v1515 = vpop.f32.mrb[0].mxu0
    %v1516 = vadd.f32 %v1419, %v1515
    %v1517 = vpop.f32.mrb[0].mxu0
    %1518 = vmatprep.mubr.bf16.mxu0 0
    %1519 = vmatmul.mubr.bf16.gmra.mrb[0].mxu0 %v1356
    %v1520 = vpop.f32.mrb[0].mxu0
    %v1521 = vadd.f32 %v1424, %v1520
    %v1522 = vpop.f32.mrb[0].mxu0
    %v1523 = vpop.f32.mrb[0].mxu0
    %v1524 = vadd.f32 %v1427, %v1523
    %v1525 = vpop.f32.mrb[0].mxu0
    %1526 = vmatprep.mubr.bf16.mxu0 0
    %1527 = vmatmul.mubr.bf16.gmra.mrb[0].mxu0 %v1359
    %v1528 = vpop.f32.mrb[0].mxu0
    %v1529 = vadd.f32 %v1432, %v1528
    %v1530 = vpop.f32.mrb[0].mxu0
    %v1531 = vpop.f32.mrb[0].mxu0
    %v1532 = vadd.f32 %v1435, %v1531
    %v1533 = vpop.f32.mrb[0].mxu0
    %1534 = vmatprep.mubr.bf16.mxu0 0
    %1535 = vmatmul.mubr.bf16.gmra.mrb[0].mxu0 %v1362
    %v1536 = vpop.f32.mrb[0].mxu0
    %v1537 = vadd.f32 %v1440, %v1536
    %v1538 = vpop.f32.mrb[0].mxu0
    %v1539 = vpop.f32.mrb[0].mxu0
    %v1540 = vadd.f32 %v1443, %v1539
    %v1541 = vpop.f32.mrb[0].mxu0
    %1542 = vmatprep.mubr.bf16.mxu0 0
    %1543 = vmatmul.mubr.bf16.gmra.mrb[0].mxu0 %v1365
    %v1544 = vpop.f32.mrb[0].mxu0
    %v1545 = vadd.f32 %v1448, %v1544
    %v1546 = vpop.f32.mrb[0].mxu0
    %v1547 = vpop.f32.mrb[0].mxu0
    %v1548 = vadd.f32 %v1451, %v1547
    %v1549 = vpop.f32.mrb[0].mxu0
    %1550 = vmatprep.mubr.bf16.mxu0 0
    %1551 = vmatmul.mubr.bf16.gmra.mrb[0].mxu0 %v1368
    %v1552 = vpop.f32.mrb[0].mxu0
    %v1553 = vadd.f32 %v1456, %v1552
    %v1554 = vpop.f32.mrb[0].mxu0
    %v1555 = vpop.f32.mrb[0].mxu0
    %v1556 = vadd.f32 %v1459, %v1555
    %v1557 = vpop.f32.mrb[0].mxu0
    %1558 = vmatprep.mubr.bf16.mxu0 0
    %1559 = vmatmul.mubr.bf16.gmra.mrb[0].mxu0 %v1371
    %v1560 = vpop.f32.mrb[0].mxu0
    %v1561 = vadd.f32 %v1464, %v1560
    %v1562 = vpop.f32.mrb[0].mxu0
    %v1563 = vpop.f32.mrb[0].mxu0
    %v1564 = vadd.f32 %v1467, %v1563
    %v1565 = vpop.f32.mrb[0].mxu0
    %1566 = vdwg.mxu0
    %v1567 = vmul.f32 %v1505, %v1505
    %v1568 = vmul.f32 %v1508, %v1508
    %v1569 = vmul.f32 %v1513, %v1513
    %v1570 = vmul.f32 %v1516, %v1516
    %v1571 = vmul.f32 %v1521, %v1521
    %v1572 = vmul.f32 %v1524, %v1524
    %v1573 = vmul.f32 %v1529, %v1529
    %v1574 = vmul.f32 %v1532, %v1532
    %v1575 = vmul.f32 %v1537, %v1537
    %v1576 = vmul.f32 %v1540, %v1540
    %v1577 = vmul.f32 %v1545, %v1545
    %v1578 = vmul.f32 %v1548, %v1548
    %v1579 = vmul.f32 %v1553, %v1553
    %v1580 = vmul.f32 %v1556, %v1556
    %v1581 = vmul.f32 %v1561, %v1561
    %v1582 = vmul.f32 %v1564, %v1564
    %1583 = vadd.xlane.f32.xlu0 %v1567
    %v1584 = vpop.xlane.xlu0 %1583
    %1585 = vadd.xlane.f32.xlu0 %v1568
    %v1586 = vpop.xlane.xlu0 %1585
    %1587 = vadd.xlane.f32.xlu0 %v1569
    %v1588 = vpop.xlane.xlu0 %1587
    %1589 = vadd.xlane.f32.xlu0 %v1570
    %v1590 = vpop.xlane.xlu0 %1589
    %1591 = vadd.xlane.f32.xlu0 %v1571
    %v1592 = vpop.xlane.xlu0 %1591
    %1593 = vadd.xlane.f32.xlu0 %v1572
    %v1594 = vpop.xlane.xlu0 %1593
    %1595 = vadd.xlane.f32.xlu0 %v1573
    %v1596 = vpop.xlane.xlu0 %1595
    %1597 = vadd.xlane.f32.xlu0 %v1574
    %v1598 = vpop.xlane.xlu0 %1597
    %1599 = vadd.xlane.f32.xlu0 %v1575
    %v1600 = vpop.xlane.xlu0 %1599
    %1601 = vadd.xlane.f32.xlu0 %v1576
    %v1602 = vpop.xlane.xlu0 %1601
    %1603 = vadd.xlane.f32.xlu0 %v1577
    %v1604 = vpop.xlane.xlu0 %1603
    %1605 = vadd.xlane.f32.xlu0 %v1578
    %v1606 = vpop.xlane.xlu0 %1605
    %1607 = vadd.xlane.f32.xlu0 %v1579
    %v1608 = vpop.xlane.xlu0 %1607
    %1609 = vadd.xlane.f32.xlu0 %v1580
    %v1610 = vpop.xlane.xlu0 %1609
    %1611 = vadd.xlane.f32.xlu0 %v1581
    %v1612 = vpop.xlane.xlu0 %1611
    %1613 = vadd.xlane.f32.xlu0 %v1582
    %v1614 = vpop.xlane.xlu0 %1613
    %v1615 = vmax.f32 %v1584, 1e-24
    %v1616 = vmax.f32 %v1586, 1e-24
    %v1617 = vmax.f32 %v1588, 1e-24
    %v1618 = vmax.f32 %v1590, 1e-24
    %v1619 = vmax.f32 %v1592, 1e-24
    %v1620 = vmax.f32 %v1594, 1e-24
    %v1621 = vmax.f32 %v1596, 1e-24
    %v1622 = vmax.f32 %v1598, 1e-24
    %v1623 = vmax.f32 %v1600, 1e-24
    %v1624 = vmax.f32 %v1602, 1e-24
    %v1625 = vmax.f32 %v1604, 1e-24
    %v1626 = vmax.f32 %v1606, 1e-24
    %v1627 = vmax.f32 %v1608, 1e-24
    %v1628 = vmax.f32 %v1610, 1e-24
    %v1629 = vmax.f32 %v1612, 1e-24
    %v1630 = vmax.f32 %v1614, 1e-24
    %v1631 = vrsqrt.pop %v1615
    %v1632 = vrsqrt.pop %v1616
    %v1633 = vrsqrt.pop %v1617
    %v1634 = vrsqrt.pop %v1618
    %v1635 = vrsqrt.pop %v1619
    %v1636 = vrsqrt.pop %v1620
    %v1637 = vrsqrt.pop %v1621
    %v1638 = vrsqrt.pop %v1622
    %v1639 = vrsqrt.pop %v1623
    %v1640 = vrsqrt.pop %v1624
    %v1641 = vrsqrt.pop %v1625
    %v1642 = vrsqrt.pop %v1626
    %v1643 = vrsqrt.pop %v1627
    %v1644 = vrsqrt.pop %v1628
    %v1645 = vrsqrt.pop %v1629
    %v1646 = vrsqrt.pop %v1630
    %v1647 = vmul.f32 %v1505, %v1631
    %v1648 = vmul.f32 %v1508, %v1632
    %v1649 = vmul.f32 %v1513, %v1633
    %v1650 = vmul.f32 %v1516, %v1634
    %v1651 = vmul.f32 %v1521, %v1635
    %v1652 = vmul.f32 %v1524, %v1636
    %v1653 = vmul.f32 %v1529, %v1637
    %v1654 = vmul.f32 %v1532, %v1638
    %v1655 = vmul.f32 %v1537, %v1639
    %v1656 = vmul.f32 %v1540, %v1640
    %v1657 = vmul.f32 %v1545, %v1641
    %v1658 = vmul.f32 %v1548, %v1642
    %v1659 = vmul.f32 %v1553, %v1643
    %v1660 = vmul.f32 %v1556, %v1644
    %v1661 = vmul.f32 %v1561, %v1645
    %v1662 = vmul.f32 %v1564, %v1646
    %1663 = vset.pattern.permute.xlu0 4
    %1664 = vperm.xlu0 %1663, %v16
    %v1665 = vpop.permute.xlu0 %1664
    %1666 = vset.pattern.permute.xlu0 4
    %1667 = vperm.xlu0 %1666, %v17
    %v1668 = vpop.permute.xlu0 %1667
    %1669 = vset.pattern.permute.xlu0 4
    %1670 = vperm.xlu0 %1669, %v18
    %v1671 = vpop.permute.xlu0 %1670
    %1672 = vset.pattern.permute.xlu0 4
    %1673 = vperm.xlu0 %1672, %v19
    %v1674 = vpop.permute.xlu0 %1673
    %1675 = vset.pattern.permute.xlu0 4
    %1676 = vperm.xlu0 %1675, %v20
    %v1677 = vpop.permute.xlu0 %1676
    %1678 = vset.pattern.permute.xlu0 4
    %1679 = vperm.xlu0 %1678, %v21
    %v1680 = vpop.permute.xlu0 %1679
    %1681 = vset.pattern.permute.xlu0 4
    %1682 = vperm.xlu0 %1681, %v22
    %v1683 = vpop.permute.xlu0 %1682
    %1684 = vset.pattern.permute.xlu0 4
    %1685 = vperm.xlu0 %1684, %v23
    %v1686 = vpop.permute.xlu0 %1685
    %1687 = vset.pattern.permute.xlu0 4
    %1688 = vperm.xlu0 %1687, %v24
    %v1689 = vpop.permute.xlu0 %1688
    %1690 = vset.pattern.permute.xlu0 4
    %1691 = vperm.xlu0 %1690, %v25
    %v1692 = vpop.permute.xlu0 %1691
    %1693 = vset.pattern.permute.xlu0 4
    %1694 = vperm.xlu0 %1693, %v26
    %v1695 = vpop.permute.xlu0 %1694
    %1696 = vset.pattern.permute.xlu0 4
    %1697 = vperm.xlu0 %1696, %v27
    %v1698 = vpop.permute.xlu0 %1697
    %1699 = vset.pattern.permute.xlu0 4
    %1700 = vperm.xlu0 %1699, %v28
    %v1701 = vpop.permute.xlu0 %1700
    %1702 = vset.pattern.permute.xlu0 4
    %1703 = vperm.xlu0 %1702, %v29
    %v1704 = vpop.permute.xlu0 %1703
    %1705 = vset.pattern.permute.xlu0 4
    %1706 = vperm.xlu0 %1705, %v30
    %v1707 = vpop.permute.xlu0 %1706
    %1708 = vset.pattern.permute.xlu0 4
    %1709 = vperm.xlu0 %1708, %v31
    %v1710 = vpop.permute.xlu0 %1709
    %vm1711 = vcmp.eq.s32.totalorder %v1665, %v42
    %vm1712 = vcmp.eq.s32.totalorder %v1668, %v42
    %vm1713 = vcmp.eq.s32.totalorder %v1671, %v42
    %vm1714 = vcmp.eq.s32.totalorder %v1674, %v42
    %vm1715 = vcmp.eq.s32.totalorder %v1677, %v42
    %vm1716 = vcmp.eq.s32.totalorder %v1680, %v42
    %vm1717 = vcmp.eq.s32.totalorder %v1683, %v42
    %vm1718 = vcmp.eq.s32.totalorder %v1686, %v42
    %vm1719 = vcmp.eq.s32.totalorder %v1689, %v42
    %vm1720 = vcmp.eq.s32.totalorder %v1692, %v42
    %vm1721 = vcmp.eq.s32.totalorder %v1695, %v42
    %vm1722 = vcmp.eq.s32.totalorder %v1698, %v42
    %vm1723 = vcmp.eq.s32.totalorder %v1701, %v42
    %vm1724 = vcmp.eq.s32.totalorder %v1704, %v42
    %vm1725 = vcmp.eq.s32.totalorder %v1707, %v42
    %vm1726 = vcmp.eq.s32.totalorder %v1710, %v42
    %v1727 = vsel %vm1711, 1, 0
    %v1728 = vsel %vm1712, 1, 0
    %v1729 = vsel %vm1713, 1, 0
    %v1730 = vsel %vm1714, 1, 0
    %v1731 = vsel %vm1715, 1, 0
    %v1732 = vsel %vm1716, 1, 0
    %v1733 = vsel %vm1717, 1, 0
    %v1734 = vsel %vm1718, 1, 0
    %v1735 = vsel %vm1719, 1, 0
    %v1736 = vsel %vm1720, 1, 0
    %v1737 = vsel %vm1721, 1, 0
    %v1738 = vsel %vm1722, 1, 0
    %v1739 = vsel %vm1723, 1, 0
    %v1740 = vsel %vm1724, 1, 0
    %v1741 = vsel %vm1725, 1, 0
    %v1742 = vsel %vm1726, 1, 0
    %v1743 = vcvt.s32.f32 %v1727
    %v1744 = vcvt.s32.f32 %v1728
    %v1745 = vcvt.s32.f32 %v1729
    %v1746 = vcvt.s32.f32 %v1730
    %v1747 = vcvt.s32.f32 %v1731
    %v1748 = vcvt.s32.f32 %v1732
    %v1749 = vcvt.s32.f32 %v1733
    %v1750 = vcvt.s32.f32 %v1734
    %v1751 = vcvt.s32.f32 %v1735
    %v1752 = vcvt.s32.f32 %v1736
    %v1753 = vcvt.s32.f32 %v1737
    %v1754 = vcvt.s32.f32 %v1738
    %v1755 = vcvt.s32.f32 %v1739
    %v1756 = vcvt.s32.f32 %v1740
    %v1757 = vcvt.s32.f32 %v1741
    %v1758 = vcvt.s32.f32 %v1742
    %v1759 = vpack.c.bf16 %v1744, %v1743
    %v1760 = vpack.c.bf16 %v1746, %v1745
    %v1761 = vpack.c.bf16 %v1748, %v1747
    %v1762 = vpack.c.bf16 %v1750, %v1749
    %v1763 = vpack.c.bf16 %v1752, %v1751
    %v1764 = vpack.c.bf16 %v1754, %v1753
    %v1765 = vpack.c.bf16 %v1756, %v1755
    %v1766 = vpack.c.bf16 %v1758, %v1757
    %v1768 = vsel %vm601, %v1759, 0
    %v1771 = vsel %vm601, %v1760, 0
    %v1774 = vsel %vm601, %v1761, 0
    %v1777 = vsel %vm601, %v1762, 0
    %v1780 = vsel %vm601, %v1763, 0
    %v1783 = vsel %vm601, %v1764, 0
    %v1786 = vsel %vm601, %v1765, 0
    %v1789 = vsel %vm601, %v1766, 0
    %1791 = vmatprep.subr.bf16.mxu0 0
    %1792 = vmatpush1.bf16.msra.mxu0 %v628
    %1793 = vmatprep.subr.bf16.mxu0 0
    %1794 = vmatpush1.bf16.msra.mxu0 0
    %1795 = vmatprep.subr.bf16.mxu0 0
    %1796 = vmatpush1.bf16.msra.mxu0 0
    %1797 = vmatprep.subr.bf16.mxu0 0
    %1798 = vmatpush1.bf16.msra.mxu0 0
    %1799 = vmatprep.subr.bf16.mxu0 0
    %1800 = vmatpush1.bf16.msra.mxu0 0
    %1801 = vmatprep.subr.bf16.mxu0 0
    %1802 = vmatpush1.bf16.msra.mxu0 0
    %1803 = vmatprep.subr.bf16.mxu0 0
    %1804 = vmatpush1.bf16.msra.mxu0 0
    %1805 = vmatprep.subr.bf16.mxu0 0
    %1806 = vmatpush1.bf16.msra.mxu0 0
    %1807 = vmatprep.subr.bf16.mxu0 0
    %1808 = vmatpush1.bf16.msra.mxu0 0
    %1809 = vmatprep.subr.bf16.mxu0 0
    %1810 = vmatpush1.bf16.msra.mxu0 0
    %1811 = vmatprep.subr.bf16.mxu0 0
    %1812 = vmatpush1.bf16.msra.mxu0 0
    %1813 = vmatprep.subr.bf16.mxu0 0
    %1814 = vmatpush1.bf16.msra.mxu0 0
    %1815 = vmatprep.subr.bf16.mxu0 0
    %1816 = vmatpush1.bf16.msra.mxu0 0
    %1817 = vmatprep.subr.bf16.mxu0 0
    %1818 = vmatpush1.bf16.msra.mxu0 0
    %1819 = vmatprep.subr.bf16.mxu0 0
    %1820 = vmatpush1.bf16.msra.mxu0 0
    %1821 = vmatprep.subr.bf16.mxu0 0
    %1822 = vmatpush1.bf16.msra.mxu0 0
    %1823 = vmatprep.mubr.bf16.mxu0 0
    %1824 = vmatmul.mubr.bf16.gmra.mrb[0].mxu0 %v1768
    %v1825 = vpop.f32.mrb[0].mxu0
    %v1826 = vadd.f32 0.0, %v1825
    %v1827 = vpop.f32.mrb[0].mxu0
    %v1828 = vpop.f32.mrb[0].mxu0
    %v1829 = vadd.f32 0.0, %v1828
    %v1830 = vpop.f32.mrb[0].mxu0
    %1831 = vmatprep.mubr.bf16.mxu0 0
    %1832 = vmatmul.mubr.bf16.gmra.mrb[0].mxu0 %v1771
    %v1833 = vpop.f32.mrb[0].mxu0
    %v1834 = vadd.f32 0.0, %v1833
    %v1835 = vpop.f32.mrb[0].mxu0
    %v1836 = vpop.f32.mrb[0].mxu0
    %v1837 = vadd.f32 0.0, %v1836
    %v1838 = vpop.f32.mrb[0].mxu0
    %1839 = vmatprep.mubr.bf16.mxu0 0
    %1840 = vmatmul.mubr.bf16.gmra.mrb[0].mxu0 %v1774
    %v1841 = vpop.f32.mrb[0].mxu0
    %v1842 = vadd.f32 0.0, %v1841
    %v1843 = vpop.f32.mrb[0].mxu0
    %v1844 = vpop.f32.mrb[0].mxu0
    %v1845 = vadd.f32 0.0, %v1844
    %v1846 = vpop.f32.mrb[0].mxu0
    %1847 = vmatprep.mubr.bf16.mxu0 0
    %1848 = vmatmul.mubr.bf16.gmra.mrb[0].mxu0 %v1777
    %v1849 = vpop.f32.mrb[0].mxu0
    %v1850 = vadd.f32 0.0, %v1849
    %v1851 = vpop.f32.mrb[0].mxu0
    %v1852 = vpop.f32.mrb[0].mxu0
    %v1853 = vadd.f32 0.0, %v1852
    %v1854 = vpop.f32.mrb[0].mxu0
    %1855 = vmatprep.mubr.bf16.mxu0 0
    %1856 = vmatmul.mubr.bf16.gmra.mrb[0].mxu0 %v1780
    %v1857 = vpop.f32.mrb[0].mxu0
    %v1858 = vadd.f32 0.0, %v1857
    %v1859 = vpop.f32.mrb[0].mxu0
    %v1860 = vpop.f32.mrb[0].mxu0
    %v1861 = vadd.f32 0.0, %v1860
    %v1862 = vpop.f32.mrb[0].mxu0
    %1863 = vmatprep.mubr.bf16.mxu0 0
    %1864 = vmatmul.mubr.bf16.gmra.mrb[0].mxu0 %v1783
    %v1865 = vpop.f32.mrb[0].mxu0
    %v1866 = vadd.f32 0.0, %v1865
    %v1867 = vpop.f32.mrb[0].mxu0
    %v1868 = vpop.f32.mrb[0].mxu0
    %v1869 = vadd.f32 0.0, %v1868
    %v1870 = vpop.f32.mrb[0].mxu0
    %1871 = vmatprep.mubr.bf16.mxu0 0
    %1872 = vmatmul.mubr.bf16.gmra.mrb[0].mxu0 %v1786
    %v1873 = vpop.f32.mrb[0].mxu0
    %v1874 = vadd.f32 0.0, %v1873
    %v1875 = vpop.f32.mrb[0].mxu0
    %v1876 = vpop.f32.mrb[0].mxu0
    %v1877 = vadd.f32 0.0, %v1876
    %v1878 = vpop.f32.mrb[0].mxu0
    %1879 = vmatprep.mubr.bf16.mxu0 0
    %1880 = vmatmul.mubr.bf16.gmra.mrb[0].mxu0 %v1789
    %v1881 = vpop.f32.mrb[0].mxu0
    %v1882 = vadd.f32 0.0, %v1881
    %v1883 = vpop.f32.mrb[0].mxu0
    %v1884 = vpop.f32.mrb[0].mxu0
    %v1885 = vadd.f32 0.0, %v1884
    %v1886 = vpop.f32.mrb[0].mxu0
    %1887 = vdwg.mxu0
    %1888 = vmatprep.subr.bf16.mxu0 0
    %1889 = vmatpush1.bf16.msra.mxu0 %v728
    %1890 = vmatprep.subr.bf16.mxu0 0
    %1891 = vmatpush1.bf16.msra.mxu0 0
    %1892 = vmatprep.subr.bf16.mxu0 0
    %1893 = vmatpush1.bf16.msra.mxu0 0
    %1894 = vmatprep.subr.bf16.mxu0 0
    %1895 = vmatpush1.bf16.msra.mxu0 0
    %1896 = vmatprep.subr.bf16.mxu0 0
    %1897 = vmatpush1.bf16.msra.mxu0 0
    %1898 = vmatprep.subr.bf16.mxu0 0
    %1899 = vmatpush1.bf16.msra.mxu0 0
    %1900 = vmatprep.subr.bf16.mxu0 0
    %1901 = vmatpush1.bf16.msra.mxu0 0
    %1902 = vmatprep.subr.bf16.mxu0 0
    %1903 = vmatpush1.bf16.msra.mxu0 0
    %1904 = vmatprep.subr.bf16.mxu0 0
    %1905 = vmatpush1.bf16.msra.mxu0 0
    %1906 = vmatprep.subr.bf16.mxu0 0
    %1907 = vmatpush1.bf16.msra.mxu0 0
    %1908 = vmatprep.subr.bf16.mxu0 0
    %1909 = vmatpush1.bf16.msra.mxu0 0
    %1910 = vmatprep.subr.bf16.mxu0 0
    %1911 = vmatpush1.bf16.msra.mxu0 0
    %1912 = vmatprep.subr.bf16.mxu0 0
    %1913 = vmatpush1.bf16.msra.mxu0 0
    %1914 = vmatprep.subr.bf16.mxu0 0
    %1915 = vmatpush1.bf16.msra.mxu0 0
    %1916 = vmatprep.subr.bf16.mxu0 0
    %1917 = vmatpush1.bf16.msra.mxu0 0
    %1918 = vmatprep.subr.bf16.mxu0 0
    %1919 = vmatpush1.bf16.msra.mxu0 0
    %1920 = vmatprep.mubr.bf16.mxu0 0
    %1921 = vmatmul.mubr.bf16.gmra.mrb[0].mxu0 %v1768
    %v1922 = vpop.f32.mrb[0].mxu0
    %v1923 = vadd.f32 %v1826, %v1922
    %v1924 = vpop.f32.mrb[0].mxu0
    %v1925 = vpop.f32.mrb[0].mxu0
    %v1926 = vadd.f32 %v1829, %v1925
    %v1927 = vpop.f32.mrb[0].mxu0
    %1928 = vmatprep.mubr.bf16.mxu0 0
    %1929 = vmatmul.mubr.bf16.gmra.mrb[0].mxu0 %v1771
    %v1930 = vpop.f32.mrb[0].mxu0
    %v1931 = vadd.f32 %v1834, %v1930
    %v1932 = vpop.f32.mrb[0].mxu0
    %v1933 = vpop.f32.mrb[0].mxu0
    %v1934 = vadd.f32 %v1837, %v1933
    %v1935 = vpop.f32.mrb[0].mxu0
    %1936 = vmatprep.mubr.bf16.mxu0 0
    %1937 = vmatmul.mubr.bf16.gmra.mrb[0].mxu0 %v1774
    %v1938 = vpop.f32.mrb[0].mxu0
    %v1939 = vadd.f32 %v1842, %v1938
    %v1940 = vpop.f32.mrb[0].mxu0
    %v1941 = vpop.f32.mrb[0].mxu0
    %v1942 = vadd.f32 %v1845, %v1941
    %v1943 = vpop.f32.mrb[0].mxu0
    %1944 = vmatprep.mubr.bf16.mxu0 0
    %1945 = vmatmul.mubr.bf16.gmra.mrb[0].mxu0 %v1777
    %v1946 = vpop.f32.mrb[0].mxu0
    %v1947 = vadd.f32 %v1850, %v1946
    %v1948 = vpop.f32.mrb[0].mxu0
    %v1949 = vpop.f32.mrb[0].mxu0
    %v1950 = vadd.f32 %v1853, %v1949
    %v1951 = vpop.f32.mrb[0].mxu0
    %1952 = vmatprep.mubr.bf16.mxu0 0
    %1953 = vmatmul.mubr.bf16.gmra.mrb[0].mxu0 %v1780
    %v1954 = vpop.f32.mrb[0].mxu0
    %v1955 = vadd.f32 %v1858, %v1954
    %v1956 = vpop.f32.mrb[0].mxu0
    %v1957 = vpop.f32.mrb[0].mxu0
    %v1958 = vadd.f32 %v1861, %v1957
    %v1959 = vpop.f32.mrb[0].mxu0
    %1960 = vmatprep.mubr.bf16.mxu0 0
    %1961 = vmatmul.mubr.bf16.gmra.mrb[0].mxu0 %v1783
    %v1962 = vpop.f32.mrb[0].mxu0
    %v1963 = vadd.f32 %v1866, %v1962
    %v1964 = vpop.f32.mrb[0].mxu0
    %v1965 = vpop.f32.mrb[0].mxu0
    %v1966 = vadd.f32 %v1869, %v1965
    %v1967 = vpop.f32.mrb[0].mxu0
    %1968 = vmatprep.mubr.bf16.mxu0 0
    %1969 = vmatmul.mubr.bf16.gmra.mrb[0].mxu0 %v1786
    %v1970 = vpop.f32.mrb[0].mxu0
    %v1971 = vadd.f32 %v1874, %v1970
    %v1972 = vpop.f32.mrb[0].mxu0
    %v1973 = vpop.f32.mrb[0].mxu0
    %v1974 = vadd.f32 %v1877, %v1973
    %v1975 = vpop.f32.mrb[0].mxu0
    %1976 = vmatprep.mubr.bf16.mxu0 0
    %1977 = vmatmul.mubr.bf16.gmra.mrb[0].mxu0 %v1789
    %v1978 = vpop.f32.mrb[0].mxu0
    %v1979 = vadd.f32 %v1882, %v1978
    %v1980 = vpop.f32.mrb[0].mxu0
    %v1981 = vpop.f32.mrb[0].mxu0
    %v1982 = vadd.f32 %v1885, %v1981
    %v1983 = vpop.f32.mrb[0].mxu0
    %1984 = vdwg.mxu0
    %1985 = vset.pattern.permute.xlu0 5
    %1986 = vperm.xlu0 %1985, %v16
    %v1987 = vpop.permute.xlu0 %1986
    %1988 = vset.pattern.permute.xlu0 5
    %1989 = vperm.xlu0 %1988, %v17
    %v1990 = vpop.permute.xlu0 %1989
    %1991 = vset.pattern.permute.xlu0 5
    %1992 = vperm.xlu0 %1991, %v18
    %v1993 = vpop.permute.xlu0 %1992
    %1994 = vset.pattern.permute.xlu0 5
    %1995 = vperm.xlu0 %1994, %v19
    %v1996 = vpop.permute.xlu0 %1995
    %1997 = vset.pattern.permute.xlu0 5
    %1998 = vperm.xlu0 %1997, %v20
    %v1999 = vpop.permute.xlu0 %1998
    %2000 = vset.pattern.permute.xlu0 5
    %2001 = vperm.xlu0 %2000, %v21
    %v2002 = vpop.permute.xlu0 %2001
    %2003 = vset.pattern.permute.xlu0 5
    %2004 = vperm.xlu0 %2003, %v22
    %v2005 = vpop.permute.xlu0 %2004
    %2006 = vset.pattern.permute.xlu0 5
    %2007 = vperm.xlu0 %2006, %v23
    %v2008 = vpop.permute.xlu0 %2007
    %2009 = vset.pattern.permute.xlu0 5
    %2010 = vperm.xlu0 %2009, %v24
    %v2011 = vpop.permute.xlu0 %2010
    %2012 = vset.pattern.permute.xlu0 5
    %2013 = vperm.xlu0 %2012, %v25
    %v2014 = vpop.permute.xlu0 %2013
    %2015 = vset.pattern.permute.xlu0 5
    %2016 = vperm.xlu0 %2015, %v26
    %v2017 = vpop.permute.xlu0 %2016
    %2018 = vset.pattern.permute.xlu0 5
    %2019 = vperm.xlu0 %2018, %v27
    %v2020 = vpop.permute.xlu0 %2019
    %2021 = vset.pattern.permute.xlu0 5
    %2022 = vperm.xlu0 %2021, %v28
    %v2023 = vpop.permute.xlu0 %2022
    %2024 = vset.pattern.permute.xlu0 5
    %2025 = vperm.xlu0 %2024, %v29
    %v2026 = vpop.permute.xlu0 %2025
    %2027 = vset.pattern.permute.xlu0 5
    %2028 = vperm.xlu0 %2027, %v30
    %v2029 = vpop.permute.xlu0 %2028
    %2030 = vset.pattern.permute.xlu0 5
    %2031 = vperm.xlu0 %2030, %v31
    %v2032 = vpop.permute.xlu0 %2031
    %vm2033 = vcmp.eq.s32.totalorder %v1987, %v42
    %vm2034 = vcmp.eq.s32.totalorder %v1990, %v42
    %vm2035 = vcmp.eq.s32.totalorder %v1993, %v42
    %vm2036 = vcmp.eq.s32.totalorder %v1996, %v42
    %vm2037 = vcmp.eq.s32.totalorder %v1999, %v42
    %vm2038 = vcmp.eq.s32.totalorder %v2002, %v42
    %vm2039 = vcmp.eq.s32.totalorder %v2005, %v42
    %vm2040 = vcmp.eq.s32.totalorder %v2008, %v42
    %vm2041 = vcmp.eq.s32.totalorder %v2011, %v42
    %vm2042 = vcmp.eq.s32.totalorder %v2014, %v42
    %vm2043 = vcmp.eq.s32.totalorder %v2017, %v42
    %vm2044 = vcmp.eq.s32.totalorder %v2020, %v42
    %vm2045 = vcmp.eq.s32.totalorder %v2023, %v42
    %vm2046 = vcmp.eq.s32.totalorder %v2026, %v42
    %vm2047 = vcmp.eq.s32.totalorder %v2029, %v42
    %vm2048 = vcmp.eq.s32.totalorder %v2032, %v42
    %v2049 = vsel %vm2033, 1, 0
    %v2050 = vsel %vm2034, 1, 0
    %v2051 = vsel %vm2035, 1, 0
    %v2052 = vsel %vm2036, 1, 0
    %v2053 = vsel %vm2037, 1, 0
    %v2054 = vsel %vm2038, 1, 0
    %v2055 = vsel %vm2039, 1, 0
    %v2056 = vsel %vm2040, 1, 0
    %v2057 = vsel %vm2041, 1, 0
    %v2058 = vsel %vm2042, 1, 0
    %v2059 = vsel %vm2043, 1, 0
    %v2060 = vsel %vm2044, 1, 0
    %v2061 = vsel %vm2045, 1, 0
    %v2062 = vsel %vm2046, 1, 0
    %v2063 = vsel %vm2047, 1, 0
    %v2064 = vsel %vm2048, 1, 0
    %v2065 = vcvt.s32.f32 %v2049
    %v2066 = vcvt.s32.f32 %v2050
    %v2067 = vcvt.s32.f32 %v2051
    %v2068 = vcvt.s32.f32 %v2052
    %v2069 = vcvt.s32.f32 %v2053
    %v2070 = vcvt.s32.f32 %v2054
    %v2071 = vcvt.s32.f32 %v2055
    %v2072 = vcvt.s32.f32 %v2056
    %v2073 = vcvt.s32.f32 %v2057
    %v2074 = vcvt.s32.f32 %v2058
    %v2075 = vcvt.s32.f32 %v2059
    %v2076 = vcvt.s32.f32 %v2060
    %v2077 = vcvt.s32.f32 %v2061
    %v2078 = vcvt.s32.f32 %v2062
    %v2079 = vcvt.s32.f32 %v2063
    %v2080 = vcvt.s32.f32 %v2064
    %v2081 = vpack.c.bf16 %v2066, %v2065
    %v2082 = vpack.c.bf16 %v2068, %v2067
    %v2083 = vpack.c.bf16 %v2070, %v2069
    %v2084 = vpack.c.bf16 %v2072, %v2071
    %v2085 = vpack.c.bf16 %v2074, %v2073
    %v2086 = vpack.c.bf16 %v2076, %v2075
    %v2087 = vpack.c.bf16 %v2078, %v2077
    %v2088 = vpack.c.bf16 %v2080, %v2079
    %v2090 = vsel %vm169, %v2081, 0
    %v2093 = vsel %vm169, %v2082, 0
    %v2096 = vsel %vm169, %v2083, 0
    %v2099 = vsel %vm169, %v2084, 0
    %v2102 = vsel %vm169, %v2085, 0
    %v2105 = vsel %vm169, %v2086, 0
    %v2108 = vsel %vm169, %v2087, 0
    %v2111 = vsel %vm169, %v2088, 0
    %2113 = vmatprep.subr.bf16.mxu0 0
    %2114 = vmatpush1.bf16.msra.mxu0 %v165
    %2115 = vmatprep.subr.bf16.mxu0 0
    %2116 = vmatpush1.bf16.msra.mxu0 %v166
    %2117 = vmatprep.subr.bf16.mxu0 0
    %2118 = vmatpush1.bf16.msra.mxu0 %v167
    %2119 = vmatprep.subr.bf16.mxu0 0
    %2120 = vmatpush1.bf16.msra.mxu0 %v196
    %2121 = vmatprep.subr.bf16.mxu0 0
    %2122 = vmatpush1.bf16.msra.mxu0 0
    %2123 = vmatprep.subr.bf16.mxu0 0
    %2124 = vmatpush1.bf16.msra.mxu0 0
    %2125 = vmatprep.subr.bf16.mxu0 0
    %2126 = vmatpush1.bf16.msra.mxu0 0
    %2127 = vmatprep.subr.bf16.mxu0 0
    %2128 = vmatpush1.bf16.msra.mxu0 0
    %2129 = vmatprep.subr.bf16.mxu0 0
    %2130 = vmatpush1.bf16.msra.mxu0 0
    %2131 = vmatprep.subr.bf16.mxu0 0
    %2132 = vmatpush1.bf16.msra.mxu0 0
    %2133 = vmatprep.subr.bf16.mxu0 0
    %2134 = vmatpush1.bf16.msra.mxu0 0
    %2135 = vmatprep.subr.bf16.mxu0 0
    %2136 = vmatpush1.bf16.msra.mxu0 0
    %2137 = vmatprep.subr.bf16.mxu0 0
    %2138 = vmatpush1.bf16.msra.mxu0 0
    %2139 = vmatprep.subr.bf16.mxu0 0
    %2140 = vmatpush1.bf16.msra.mxu0 0
    %2141 = vmatprep.subr.bf16.mxu0 0
    %2142 = vmatpush1.bf16.msra.mxu0 0
    %2143 = vmatprep.subr.bf16.mxu0 0
    %2144 = vmatpush1.bf16.msra.mxu0 0
    %2145 = vmatprep.mubr.bf16.mxu0 0
    %2146 = vmatmul.mubr.bf16.gmra.mrb[0].mxu0 %v2090
    %v2147 = vpop.f32.mrb[0].mxu0
    %v2148 = vadd.f32 0.0, %v2147
    %v2149 = vpop.f32.mrb[0].mxu0
    %v2150 = vpop.f32.mrb[0].mxu0
    %v2151 = vadd.f32 0.0, %v2150
    %v2152 = vpop.f32.mrb[0].mxu0
    %2153 = vmatprep.mubr.bf16.mxu0 0
    %2154 = vmatmul.mubr.bf16.gmra.mrb[0].mxu0 %v2093
    %v2155 = vpop.f32.mrb[0].mxu0
    %v2156 = vadd.f32 0.0, %v2155
    %v2157 = vpop.f32.mrb[0].mxu0
    %v2158 = vpop.f32.mrb[0].mxu0
    %v2159 = vadd.f32 0.0, %v2158
    %v2160 = vpop.f32.mrb[0].mxu0
    %2161 = vmatprep.mubr.bf16.mxu0 0
    %2162 = vmatmul.mubr.bf16.gmra.mrb[0].mxu0 %v2096
    %v2163 = vpop.f32.mrb[0].mxu0
    %v2164 = vadd.f32 0.0, %v2163
    %v2165 = vpop.f32.mrb[0].mxu0
    %v2166 = vpop.f32.mrb[0].mxu0
    %v2167 = vadd.f32 0.0, %v2166
    %v2168 = vpop.f32.mrb[0].mxu0
    %2169 = vmatprep.mubr.bf16.mxu0 0
    %2170 = vmatmul.mubr.bf16.gmra.mrb[0].mxu0 %v2099
    %v2171 = vpop.f32.mrb[0].mxu0
    %v2172 = vadd.f32 0.0, %v2171
    %v2173 = vpop.f32.mrb[0].mxu0
    %v2174 = vpop.f32.mrb[0].mxu0
    %v2175 = vadd.f32 0.0, %v2174
    %v2176 = vpop.f32.mrb[0].mxu0
    %2177 = vmatprep.mubr.bf16.mxu0 0
    %2178 = vmatmul.mubr.bf16.gmra.mrb[0].mxu0 %v2102
    %v2179 = vpop.f32.mrb[0].mxu0
    %v2180 = vadd.f32 0.0, %v2179
    %v2181 = vpop.f32.mrb[0].mxu0
    %v2182 = vpop.f32.mrb[0].mxu0
    %v2183 = vadd.f32 0.0, %v2182
    %v2184 = vpop.f32.mrb[0].mxu0
    %2185 = vmatprep.mubr.bf16.mxu0 0
    %2186 = vmatmul.mubr.bf16.gmra.mrb[0].mxu0 %v2105
    %v2187 = vpop.f32.mrb[0].mxu0
    %v2188 = vadd.f32 0.0, %v2187
    %v2189 = vpop.f32.mrb[0].mxu0
    %v2190 = vpop.f32.mrb[0].mxu0
    %v2191 = vadd.f32 0.0, %v2190
    %v2192 = vpop.f32.mrb[0].mxu0
    %2193 = vmatprep.mubr.bf16.mxu0 0
    %2194 = vmatmul.mubr.bf16.gmra.mrb[0].mxu0 %v2108
    %v2195 = vpop.f32.mrb[0].mxu0
    %v2196 = vadd.f32 0.0, %v2195
    %v2197 = vpop.f32.mrb[0].mxu0
    %v2198 = vpop.f32.mrb[0].mxu0
    %v2199 = vadd.f32 0.0, %v2198
    %v2200 = vpop.f32.mrb[0].mxu0
    %2201 = vmatprep.mubr.bf16.mxu0 0
    %2202 = vmatmul.mubr.bf16.gmra.mrb[0].mxu0 %v2111
    %v2203 = vpop.f32.mrb[0].mxu0
    %v2204 = vadd.f32 0.0, %v2203
    %v2205 = vpop.f32.mrb[0].mxu0
    %v2206 = vpop.f32.mrb[0].mxu0
    %v2207 = vadd.f32 0.0, %v2206
    %v2208 = vpop.f32.mrb[0].mxu0
    %2209 = vdwg.mxu0
    %2210 = vmatprep.subr.bf16.mxu0 0
    %2211 = vmatpush1.bf16.msra.mxu0 %v147
    %2212 = vmatprep.subr.bf16.mxu0 0
    %2213 = vmatpush1.bf16.msra.mxu0 %v148
    %2214 = vmatprep.subr.bf16.mxu0 0
    %2215 = vmatpush1.bf16.msra.mxu0 %v149
    %2216 = vmatprep.subr.bf16.mxu0 0
    %2217 = vmatpush1.bf16.msra.mxu0 %v296
    %2218 = vmatprep.subr.bf16.mxu0 0
    %2219 = vmatpush1.bf16.msra.mxu0 0
    %2220 = vmatprep.subr.bf16.mxu0 0
    %2221 = vmatpush1.bf16.msra.mxu0 0
    %2222 = vmatprep.subr.bf16.mxu0 0
    %2223 = vmatpush1.bf16.msra.mxu0 0
    %2224 = vmatprep.subr.bf16.mxu0 0
    %2225 = vmatpush1.bf16.msra.mxu0 0
    %2226 = vmatprep.subr.bf16.mxu0 0
    %2227 = vmatpush1.bf16.msra.mxu0 0
    %2228 = vmatprep.subr.bf16.mxu0 0
    %2229 = vmatpush1.bf16.msra.mxu0 0
    %2230 = vmatprep.subr.bf16.mxu0 0
    %2231 = vmatpush1.bf16.msra.mxu0 0
    %2232 = vmatprep.subr.bf16.mxu0 0
    %2233 = vmatpush1.bf16.msra.mxu0 0
    %2234 = vmatprep.subr.bf16.mxu0 0
    %2235 = vmatpush1.bf16.msra.mxu0 0
    %2236 = vmatprep.subr.bf16.mxu0 0
    %2237 = vmatpush1.bf16.msra.mxu0 0
    %2238 = vmatprep.subr.bf16.mxu0 0
    %2239 = vmatpush1.bf16.msra.mxu0 0
    %2240 = vmatprep.subr.bf16.mxu0 0
    %2241 = vmatpush1.bf16.msra.mxu0 0
    %2242 = vmatprep.mubr.bf16.mxu0 0
    %2243 = vmatmul.mubr.bf16.gmra.mrb[0].mxu0 %v2090
    %v2244 = vpop.f32.mrb[0].mxu0
    %v2245 = vadd.f32 %v2148, %v2244
    %v2246 = vpop.f32.mrb[0].mxu0
    %v2247 = vpop.f32.mrb[0].mxu0
    %v2248 = vadd.f32 %v2151, %v2247
    %v2249 = vpop.f32.mrb[0].mxu0
    %2250 = vmatprep.mubr.bf16.mxu0 0
    %2251 = vmatmul.mubr.bf16.gmra.mrb[0].mxu0 %v2093
    %v2252 = vpop.f32.mrb[0].mxu0
    %v2253 = vadd.f32 %v2156, %v2252
    %v2254 = vpop.f32.mrb[0].mxu0
    %v2255 = vpop.f32.mrb[0].mxu0
    %v2256 = vadd.f32 %v2159, %v2255
    %v2257 = vpop.f32.mrb[0].mxu0
    %2258 = vmatprep.mubr.bf16.mxu0 0
    %2259 = vmatmul.mubr.bf16.gmra.mrb[0].mxu0 %v2096
    %v2260 = vpop.f32.mrb[0].mxu0
    %v2261 = vadd.f32 %v2164, %v2260
    %v2262 = vpop.f32.mrb[0].mxu0
    %v2263 = vpop.f32.mrb[0].mxu0
    %v2264 = vadd.f32 %v2167, %v2263
    %v2265 = vpop.f32.mrb[0].mxu0
    %2266 = vmatprep.mubr.bf16.mxu0 0
    %2267 = vmatmul.mubr.bf16.gmra.mrb[0].mxu0 %v2099
    %v2268 = vpop.f32.mrb[0].mxu0
    %v2269 = vadd.f32 %v2172, %v2268
    %v2270 = vpop.f32.mrb[0].mxu0
    %v2271 = vpop.f32.mrb[0].mxu0
    %v2272 = vadd.f32 %v2175, %v2271
    %v2273 = vpop.f32.mrb[0].mxu0
    %2274 = vmatprep.mubr.bf16.mxu0 0
    %2275 = vmatmul.mubr.bf16.gmra.mrb[0].mxu0 %v2102
    %v2276 = vpop.f32.mrb[0].mxu0
    %v2277 = vadd.f32 %v2180, %v2276
    %v2278 = vpop.f32.mrb[0].mxu0
    %v2279 = vpop.f32.mrb[0].mxu0
    %v2280 = vadd.f32 %v2183, %v2279
    %v2281 = vpop.f32.mrb[0].mxu0
    %2282 = vmatprep.mubr.bf16.mxu0 0
    %2283 = vmatmul.mubr.bf16.gmra.mrb[0].mxu0 %v2105
    %v2284 = vpop.f32.mrb[0].mxu0
    %v2285 = vadd.f32 %v2188, %v2284
    %v2286 = vpop.f32.mrb[0].mxu0
    %v2287 = vpop.f32.mrb[0].mxu0
    %v2288 = vadd.f32 %v2191, %v2287
    %v2289 = vpop.f32.mrb[0].mxu0
    %2290 = vmatprep.mubr.bf16.mxu0 0
    %2291 = vmatmul.mubr.bf16.gmra.mrb[0].mxu0 %v2108
    %v2292 = vpop.f32.mrb[0].mxu0
    %v2293 = vadd.f32 %v2196, %v2292
    %v2294 = vpop.f32.mrb[0].mxu0
    %v2295 = vpop.f32.mrb[0].mxu0
    %v2296 = vadd.f32 %v2199, %v2295
    %v2297 = vpop.f32.mrb[0].mxu0
    %2298 = vmatprep.mubr.bf16.mxu0 0
    %2299 = vmatmul.mubr.bf16.gmra.mrb[0].mxu0 %v2111
    %v2300 = vpop.f32.mrb[0].mxu0
    %v2301 = vadd.f32 %v2204, %v2300
    %v2302 = vpop.f32.mrb[0].mxu0
    %v2303 = vpop.f32.mrb[0].mxu0
    %v2304 = vadd.f32 %v2207, %v2303
    %v2305 = vpop.f32.mrb[0].mxu0
    %2306 = vdwg.mxu0
    %v2307 = vmul.f32 %v2245, %v2245
    %v2308 = vmul.f32 %v2248, %v2248
    %v2309 = vmul.f32 %v2253, %v2253
    %v2310 = vmul.f32 %v2256, %v2256
    %v2311 = vmul.f32 %v2261, %v2261
    %v2312 = vmul.f32 %v2264, %v2264
    %v2313 = vmul.f32 %v2269, %v2269
    %v2314 = vmul.f32 %v2272, %v2272
    %v2315 = vmul.f32 %v2277, %v2277
    %v2316 = vmul.f32 %v2280, %v2280
    %v2317 = vmul.f32 %v2285, %v2285
    %v2318 = vmul.f32 %v2288, %v2288
    %v2319 = vmul.f32 %v2293, %v2293
    %v2320 = vmul.f32 %v2296, %v2296
    %v2321 = vmul.f32 %v2301, %v2301
    %v2322 = vmul.f32 %v2304, %v2304
    %2323 = vadd.xlane.f32.xlu0 %v2307
    %v2324 = vpop.xlane.xlu0 %2323
    %2325 = vadd.xlane.f32.xlu0 %v2308
    %v2326 = vpop.xlane.xlu0 %2325
    %2327 = vadd.xlane.f32.xlu0 %v2309
    %v2328 = vpop.xlane.xlu0 %2327
    %2329 = vadd.xlane.f32.xlu0 %v2310
    %v2330 = vpop.xlane.xlu0 %2329
    %2331 = vadd.xlane.f32.xlu0 %v2311
    %v2332 = vpop.xlane.xlu0 %2331
    %2333 = vadd.xlane.f32.xlu0 %v2312
    %v2334 = vpop.xlane.xlu0 %2333
    %2335 = vadd.xlane.f32.xlu0 %v2313
    %v2336 = vpop.xlane.xlu0 %2335
    %2337 = vadd.xlane.f32.xlu0 %v2314
    %v2338 = vpop.xlane.xlu0 %2337
    %2339 = vadd.xlane.f32.xlu0 %v2315
    %v2340 = vpop.xlane.xlu0 %2339
    %2341 = vadd.xlane.f32.xlu0 %v2316
    %v2342 = vpop.xlane.xlu0 %2341
    %2343 = vadd.xlane.f32.xlu0 %v2317
    %v2344 = vpop.xlane.xlu0 %2343
    %2345 = vadd.xlane.f32.xlu0 %v2318
    %v2346 = vpop.xlane.xlu0 %2345
    %2347 = vadd.xlane.f32.xlu0 %v2319
    %v2348 = vpop.xlane.xlu0 %2347
    %2349 = vadd.xlane.f32.xlu0 %v2320
    %v2350 = vpop.xlane.xlu0 %2349
    %2351 = vadd.xlane.f32.xlu0 %v2321
    %v2352 = vpop.xlane.xlu0 %2351
    %2353 = vadd.xlane.f32.xlu0 %v2322
    %v2354 = vpop.xlane.xlu0 %2353
    %v2355 = vmax.f32 %v2324, 1e-24
    %v2356 = vmax.f32 %v2326, 1e-24
    %v2357 = vmax.f32 %v2328, 1e-24
    %v2358 = vmax.f32 %v2330, 1e-24
    %v2359 = vmax.f32 %v2332, 1e-24
    %v2360 = vmax.f32 %v2334, 1e-24
    %v2361 = vmax.f32 %v2336, 1e-24
    %v2362 = vmax.f32 %v2338, 1e-24
    %v2363 = vmax.f32 %v2340, 1e-24
    %v2364 = vmax.f32 %v2342, 1e-24
    %v2365 = vmax.f32 %v2344, 1e-24
    %v2366 = vmax.f32 %v2346, 1e-24
    %v2367 = vmax.f32 %v2348, 1e-24
    %v2368 = vmax.f32 %v2350, 1e-24
    %v2369 = vmax.f32 %v2352, 1e-24
    %v2370 = vmax.f32 %v2354, 1e-24
    %v2371 = vrsqrt.pop %v2355
    %v2372 = vrsqrt.pop %v2356
    %v2373 = vrsqrt.pop %v2357
    %v2374 = vrsqrt.pop %v2358
    %v2375 = vrsqrt.pop %v2359
    %v2376 = vrsqrt.pop %v2360
    %v2377 = vrsqrt.pop %v2361
    %v2378 = vrsqrt.pop %v2362
    %v2379 = vrsqrt.pop %v2363
    %v2380 = vrsqrt.pop %v2364
    %v2381 = vrsqrt.pop %v2365
    %v2382 = vrsqrt.pop %v2366
    %v2383 = vrsqrt.pop %v2367
    %v2384 = vrsqrt.pop %v2368
    %v2385 = vrsqrt.pop %v2369
    %v2386 = vrsqrt.pop %v2370
    %v2387 = vmul.f32 %v2245, %v2371
    %v2388 = vmul.f32 %v2248, %v2372
    %v2389 = vmul.f32 %v2253, %v2373
    %v2390 = vmul.f32 %v2256, %v2374
    %v2391 = vmul.f32 %v2261, %v2375
    %v2392 = vmul.f32 %v2264, %v2376
    %v2393 = vmul.f32 %v2269, %v2377
    %v2394 = vmul.f32 %v2272, %v2378
    %v2395 = vmul.f32 %v2277, %v2379
    %v2396 = vmul.f32 %v2280, %v2380
    %v2397 = vmul.f32 %v2285, %v2381
    %v2398 = vmul.f32 %v2288, %v2382
    %v2399 = vmul.f32 %v2293, %v2383
    %v2400 = vmul.f32 %v2296, %v2384
    %v2401 = vmul.f32 %v2301, %v2385
    %v2402 = vmul.f32 %v2304, %v2386
    %v2403 = vadd.f32 %v475, %v765
    %v2404 = vadd.f32 %v476, %v768
    %v2405 = vadd.f32 %v477, %v773
    %v2406 = vadd.f32 %v478, %v776
    %v2407 = vadd.f32 %v479, %v781
    %v2408 = vadd.f32 %v480, %v784
    %v2409 = vadd.f32 %v481, %v789
    %v2410 = vadd.f32 %v482, %v792
    %v2411 = vadd.f32 %v483, %v797
    %v2412 = vadd.f32 %v484, %v800
    %v2413 = vadd.f32 %v485, %v805
    %v2414 = vadd.f32 %v486, %v808
    %v2415 = vadd.f32 %v487, %v813
    %v2416 = vadd.f32 %v488, %v816
    %v2417 = vadd.f32 %v489, %v821
    %v2418 = vadd.f32 %v490, %v824
    %v2419 = vsub.f32 %v2403, %v1229
    %v2420 = vsub.f32 %v2404, %v1230
    %v2421 = vsub.f32 %v2405, %v1231
    %v2422 = vsub.f32 %v2406, %v1232
    %v2423 = vsub.f32 %v2407, %v1233
    %v2424 = vsub.f32 %v2408, %v1234
    %v2425 = vsub.f32 %v2409, %v1235
    %v2426 = vsub.f32 %v2410, %v1236
    %v2427 = vsub.f32 %v2411, %v1237
    %v2428 = vsub.f32 %v2412, %v1238
    %v2429 = vsub.f32 %v2413, %v1239
    %v2430 = vsub.f32 %v2414, %v1240
    %v2431 = vsub.f32 %v2415, %v1241
    %v2432 = vsub.f32 %v2416, %v1242
    %v2433 = vsub.f32 %v2417, %v1243
    %v2434 = vsub.f32 %v2418, %v1244
    %v2435 = vmul.f32 %v2419, %v2419
    %v2436 = vmul.f32 %v2420, %v2420
    %v2437 = vmul.f32 %v2421, %v2421
    %v2438 = vmul.f32 %v2422, %v2422
    %v2439 = vmul.f32 %v2423, %v2423
    %v2440 = vmul.f32 %v2424, %v2424
    %v2441 = vmul.f32 %v2425, %v2425
    %v2442 = vmul.f32 %v2426, %v2426
    %v2443 = vmul.f32 %v2427, %v2427
    %v2444 = vmul.f32 %v2428, %v2428
    %v2445 = vmul.f32 %v2429, %v2429
    %v2446 = vmul.f32 %v2430, %v2430
    %v2447 = vmul.f32 %v2431, %v2431
    %v2448 = vmul.f32 %v2432, %v2432
    %v2449 = vmul.f32 %v2433, %v2433
    %v2450 = vmul.f32 %v2434, %v2434
    %2451 = vxpose.xlu0.b32.start [1/16] %v2435, 128
    %2452 = vxpose.xlu0.b32.cont [2/16] %v2436, 128
    %2453 = vxpose.xlu0.b32.cont [3/16] %v2437, 128
    %2454 = vxpose.xlu0.b32.cont [4/16] %v2438, 128
    %2455 = vxpose.xlu0.b32.cont [5/16] %v2439, 128
    %2456 = vxpose.xlu0.b32.cont [6/16] %v2440, 128
    %2457 = vxpose.xlu0.b32.cont [7/16] %v2441, 128
    %2458 = vxpose.xlu0.b32.cont [8/16] %v2442, 128
    %2459 = vxpose.xlu0.b32.cont [9/16] %v2443, 128
    %2460 = vxpose.xlu0.b32.cont [10/16] %v2444, 128
    %2461 = vxpose.xlu0.b32.cont [11/16] %v2445, 128
    %2462 = vxpose.xlu0.b32.cont [12/16] %v2446, 128
    %2463 = vxpose.xlu0.b32.cont [13/16] %v2447, 128
    %2464 = vxpose.xlu0.b32.cont [14/16] %v2448, 128
    %2465 = vxpose.xlu0.b32.cont [15/16] %v2449, 128
    %2466 = vxpose.xlu0.b32.end [16/16] %v2450, 128
    %v2467 = vpop.trf.xlu0
    %v2468 = vpop.trf.xlu0
    %v2469 = vpop.trf.xlu0
    %v2470 = vpop.trf.xlu0
    %v2471 = vpop.trf.xlu0
    %v2472 = vpop.trf.xlu0
    %v2473 = vpop.trf.xlu0
    %v2474 = vpop.trf.xlu0
    %v2475 = vpop.trf.xlu0
    %v2476 = vpop.trf.xlu0
    %v2477 = vpop.trf.xlu0
    %v2478 = vpop.trf.xlu0
    %v2479 = vpop.trf.xlu0
    %v2480 = vpop.trf.xlu0
    %v2481 = vpop.trf.xlu0
    %v2482 = vpop.trf.xlu0
    %v2483 = vadd.f32 %v2467, %v2468
    %v2484 = vadd.f32 %v2483, %v2469
    %v2485 = vadd.f32 %v2484, %v2470
    %v2486 = vadd.f32 %v2485, %v2471
    %v2487 = vadd.f32 %v2486, %v2472
    %v2488 = vadd.f32 %v2487, %v2473
    %v2489 = vadd.f32 %v2488, %v2474
    %v2490 = vadd.f32 %v2489, %v2475
    %v2491 = vadd.f32 %v2490, %v2476
    %v2492 = vadd.f32 %v2491, %v2477
    %v2493 = vadd.f32 %v2492, %v2478
    %v2494 = vadd.f32 %v2493, %v2479
    %v2495 = vadd.f32 %v2494, %v2480
    %v2496 = vadd.f32 %v2495, %v2481
    %v2497 = vadd.f32 %v2496, %v2482
    %v2498 = vrot.slane %v2497, 4
    %v2499 = vadd.f32 %v2497, %v2498
    %v2500 = vrot.slane %v2499, 2
    %v2501 = vadd.f32 %v2499, %v2500
    %v2502 = vrot.slane %v2501, 1
    %v2503 = vadd.f32 %v2501, %v2502
    %v2504 = vrsqrt.pop %v2503
    %v2505 = vmul.f32 %v2503, %v2504
    %vm2506 = vcmp.eq.f32.partialorder %v2503, inf
    %v2507 = vsel %vm2506, %v2503, %v2505
    %vm2508 = vcmp.eq.f32.partialorder %v2503, 0.0
    %v2509 = vand.u32 %v2503, 2147483648
    %v2510 = vsel %vm2508, %v2509, %v2507
    %v2511 = vadd.f32 %v1647, %v1923
    %v2512 = vadd.f32 %v1648, %v1926
    %v2513 = vadd.f32 %v1649, %v1931
    %v2514 = vadd.f32 %v1650, %v1934
    %v2515 = vadd.f32 %v1651, %v1939
    %v2516 = vadd.f32 %v1652, %v1942
    %v2517 = vadd.f32 %v1653, %v1947
    %v2518 = vadd.f32 %v1654, %v1950
    %v2519 = vadd.f32 %v1655, %v1955
    %v2520 = vadd.f32 %v1656, %v1958
    %v2521 = vadd.f32 %v1657, %v1963
    %v2522 = vadd.f32 %v1658, %v1966
    %v2523 = vadd.f32 %v1659, %v1971
    %v2524 = vadd.f32 %v1660, %v1974
    %v2525 = vadd.f32 %v1661, %v1979
    %v2526 = vadd.f32 %v1662, %v1982
    %v2527 = vsub.f32 %v2511, %v2387
    %v2528 = vsub.f32 %v2512, %v2388
    %v2529 = vsub.f32 %v2513, %v2389
    %v2530 = vsub.f32 %v2514, %v2390
    %v2531 = vsub.f32 %v2515, %v2391
    %v2532 = vsub.f32 %v2516, %v2392
    %v2533 = vsub.f32 %v2517, %v2393
    %v2534 = vsub.f32 %v2518, %v2394
    %v2535 = vsub.f32 %v2519, %v2395
    %v2536 = vsub.f32 %v2520, %v2396
    %v2537 = vsub.f32 %v2521, %v2397
    %v2538 = vsub.f32 %v2522, %v2398
    %v2539 = vsub.f32 %v2523, %v2399
    %v2540 = vsub.f32 %v2524, %v2400
    %v2541 = vsub.f32 %v2525, %v2401
    %v2542 = vsub.f32 %v2526, %v2402
    %v2543 = vmul.f32 %v2527, %v2527
    %v2544 = vmul.f32 %v2528, %v2528
    %v2545 = vmul.f32 %v2529, %v2529
    %v2546 = vmul.f32 %v2530, %v2530
    %v2547 = vmul.f32 %v2531, %v2531
    %v2548 = vmul.f32 %v2532, %v2532
    %v2549 = vmul.f32 %v2533, %v2533
    %v2550 = vmul.f32 %v2534, %v2534
    %v2551 = vmul.f32 %v2535, %v2535
    %v2552 = vmul.f32 %v2536, %v2536
    %v2553 = vmul.f32 %v2537, %v2537
    %v2554 = vmul.f32 %v2538, %v2538
    %v2555 = vmul.f32 %v2539, %v2539
    %v2556 = vmul.f32 %v2540, %v2540
    %v2557 = vmul.f32 %v2541, %v2541
    %v2558 = vmul.f32 %v2542, %v2542
    %2559 = vxpose.xlu0.b32.start [1/16] %v2543, 128
    %2560 = vxpose.xlu0.b32.cont [2/16] %v2544, 128
    %2561 = vxpose.xlu0.b32.cont [3/16] %v2545, 128
    %2562 = vxpose.xlu0.b32.cont [4/16] %v2546, 128
    %2563 = vxpose.xlu0.b32.cont [5/16] %v2547, 128
    %2564 = vxpose.xlu0.b32.cont [6/16] %v2548, 128
    %2565 = vxpose.xlu0.b32.cont [7/16] %v2549, 128
    %2566 = vxpose.xlu0.b32.cont [8/16] %v2550, 128
    %2567 = vxpose.xlu0.b32.cont [9/16] %v2551, 128
    %2568 = vxpose.xlu0.b32.cont [10/16] %v2552, 128
    %2569 = vxpose.xlu0.b32.cont [11/16] %v2553, 128
    %2570 = vxpose.xlu0.b32.cont [12/16] %v2554, 128
    %2571 = vxpose.xlu0.b32.cont [13/16] %v2555, 128
    %2572 = vxpose.xlu0.b32.cont [14/16] %v2556, 128
    %2573 = vxpose.xlu0.b32.cont [15/16] %v2557, 128
    %2574 = vxpose.xlu0.b32.end [16/16] %v2558, 128
    %v2575 = vpop.trf.xlu0
    %v2576 = vpop.trf.xlu0
    %v2577 = vpop.trf.xlu0
    %v2578 = vpop.trf.xlu0
    %v2579 = vpop.trf.xlu0
    %v2580 = vpop.trf.xlu0
    %v2581 = vpop.trf.xlu0
    %v2582 = vpop.trf.xlu0
    %v2583 = vpop.trf.xlu0
    %v2584 = vpop.trf.xlu0
    %v2585 = vpop.trf.xlu0
    %v2586 = vpop.trf.xlu0
    %v2587 = vpop.trf.xlu0
    %v2588 = vpop.trf.xlu0
    %v2589 = vpop.trf.xlu0
    %v2590 = vpop.trf.xlu0
    %v2591 = vadd.f32 %v2575, %v2576
    %v2592 = vadd.f32 %v2591, %v2577
    %v2593 = vadd.f32 %v2592, %v2578
    %v2594 = vadd.f32 %v2593, %v2579
    %v2595 = vadd.f32 %v2594, %v2580
    %v2596 = vadd.f32 %v2595, %v2581
    %v2597 = vadd.f32 %v2596, %v2582
    %v2598 = vadd.f32 %v2597, %v2583
    %v2599 = vadd.f32 %v2598, %v2584
    %v2600 = vadd.f32 %v2599, %v2585
    %v2601 = vadd.f32 %v2600, %v2586
    %v2602 = vadd.f32 %v2601, %v2587
    %v2603 = vadd.f32 %v2602, %v2588
    %v2604 = vadd.f32 %v2603, %v2589
    %v2605 = vadd.f32 %v2604, %v2590
    %v2606 = vrot.slane %v2605, 4
    %v2607 = vadd.f32 %v2605, %v2606
    %v2608 = vrot.slane %v2607, 2
    %v2609 = vadd.f32 %v2607, %v2608
    %v2610 = vrot.slane %v2609, 1
    %v2611 = vadd.f32 %v2609, %v2610
    %v2612 = vrsqrt.pop %v2611
    %v2613 = vmul.f32 %v2611, %v2612
    %vm2614 = vcmp.eq.f32.partialorder %v2611, inf
    %v2615 = vsel %vm2614, %v2611, %v2613
    %vm2616 = vcmp.eq.f32.partialorder %v2611, 0.0
    %v2617 = vand.u32 %v2611, 2147483648
    %v2618 = vsel %vm2616, %v2617, %v2615
    %v2619 = vsel %vm194, %v2510, %v2618
    %2620 = vst [vmem:[#allocation2] sm:$0x3] %v2619
    // Predicated region
    $region14: #{tpu_custom_call.1} parent=1 // pred_check
      _
    $region15: #{tpu_custom_call.1} parent=1 // pred_check_branch
      %2622 = sbr.rel (0) target = $region17
    $region16: #{tpu_custom_call.1} parent=1 // pred_region
      %s2624 = ssub.s32 32, 32
      %2625 = vsyncadd [#allocation3], %s2624
      %s2627 = sshll.u32 [#allocation2], 4
      %s2628 = int_to_ptr.vmem [resolvable:$true] %s2627
      %2630 = dma.vmem_to_hbm [thread:$0]  %s2628, 32, %s3, [#allocation3]
    $region17: #{tpu_custom_call.1} parent=1 // pred_fallthru
      _
    // Predicated region
    $region18: #{tpu_custom_call.1} parent=1 // pred_check
      _
    $region19: #{tpu_custom_call.1} parent=1 // pred_check_branch
      %2632 = sbr.rel (0) target = $region21
    $region20: #{tpu_custom_call.1} parent=1 // pred_region
      %2633 = dma.done [#allocation3], 32
    $region21: #{tpu_custom_call.1} parent=1 // pred_fallthru
      _
    %2634 = vsyncpa [#allocation3], 1

</llo_original>
